<compile_context>
chip_gen: v6e
topology: v6e:2x2x1
jax: 0.10.0
libtpu: 0.0.40
codegen_flags: <defaults>
</compile_context>

<pallas_src>
import jax
import jax.numpy as jnp
from jax.experimental import pallas as pl
from jax.experimental.pallas import tpu as pltpu


_HID = 128           # padded lane width for all activations / outputs
_NUM_CONVS = 5
_LAYER_DIMS = [(2, 32), (32, 128), (128, 128), (128, 128), (128, 128)]


# ---------------------------------------------------------------------------
# Fused Pallas kernel
# ---------------------------------------------------------------------------
def _gcn_fused_kernel(a_ref, x_ref, wl_ref, wr_ref, b_ref, wlin_ref, blin_ref,
                      o_ref):
    """Entire GCN forward in one kernel invocation.

    a_ref    : [Np, Np]        bf16  mean-aggregation matrix (row-padded)
    x_ref    : [Np, 128]       f32   node features zero-padded to 128 lanes
    wl_ref   : [5, 128, 128]   bf16  per-layer lin_l weight (agg path), padded
    wr_ref   : [5, 128, 128]   bf16  per-layer lin_r weight (self path), padded
    b_ref    : [5, 1, 128]     f32   per-layer lin_l bias, zero-padded
    wlin_ref : [128, 128]      bf16  final Linear weight (only column 0 nonzero)
    blin_ref : [1, 128]        f32   final Linear bias  (only column 0 nonzero)
    o_ref    : [Np, 128]       f32   lane-dense output; column 0 = model output
    """
    a = a_ref[...]                                   # bf16 [Np, Np]
    x = x_ref[...].astype(jnp.bfloat16)              # bf16 [Np, 128]
    for l in range(_NUM_CONVS):                      # static unrolled layer loop
        # mean aggregation over in-neighbours (dense matmul with A), f32 acc
        agg = jnp.dot(a, x, preferred_element_type=jnp.float32).astype(jnp.bfloat16)
        # two K=128 bf16 MXU ops summed in f32 (same FLOPs as one K=256 matmul,
        # no concat buffer)
        h = (jnp.dot(agg, wl_ref[l], preferred_element_type=jnp.float32)
             + jnp.dot(x, wr_ref[l], preferred_element_type=jnp.float32)
             + b_ref[l])                             # f32 bias add
        x = jnp.maximum(h, 0.0).astype(jnp.bfloat16) # ReLU, back to bf16 for MXU
    # final Linear, kept lane-dense (padded weight); wrapper slices column 0
    o_ref[...] = (jnp.dot(x, wlin_ref[...], preferred_element_type=jnp.float32)
                  + blin_ref[...])


# ---------------------------------------------------------------------------
# Wrapper
# ---------------------------------------------------------------------------
def _full_spec(shape):
    # Whole-array block resident in VMEM (all operands tiny / well under limit).
    return pl.BlockSpec(shape, lambda: (0,) * len(shape),
                        memory_space=pltpu.MemorySpace.VMEM)


def gcn_forward(packed, x, agg):
    """packed: pre-packed/cast parameters; x: [N, Fin] f32; agg: [N, N] f32."""
    n = x.shape[0]
    n_pad = ((n + 7) // 8) * 8                       # sublane-aligned node count
    x_pad = jnp.zeros((n_pad, _HID), jnp.float32).at[:n, : x.shape[1]].set(x)
    a_pad = (jnp.zeros((n_pad, n_pad), jnp.float32)
             .at[:n, :n].set(agg)
             .astype(jnp.bfloat16))

    out = pl.pallas_call(
        _gcn_fused_kernel,
        out_shape=jax.ShapeDtypeStruct((n_pad, _HID), jnp.float32),
        in_specs=[
            _full_spec(a_pad.shape),
            _full_spec(x_pad.shape),
            _full_spec(packed["wl_all"].shape),
            _full_spec(packed["wr_all"].shape),
            _full_spec(packed["b_all"].shape),
            _full_spec(packed["lin_w"].shape),
            _full_spec(packed["lin_b"].shape),
        ],
        out_specs=_full_spec((n_pad, _HID)),
        compiler_params=pltpu.CompilerParams(vmem_limit_bytes=32 * 1024 * 1024),
    )(a_pad, x_pad, packed["wl_all"], packed["wr_all"], packed["b_all"],
      packed["lin_w"], packed["lin_b"])

    return out[:n, :1]                               # [N, 1]


# ---------------------------------------------------------------------------
# Parameters: init (true shapes) + one-time packing/casting for the kernel
# ---------------------------------------------------------------------------
def init_params(key):
    params = {"convs": []}
    for (fin, fout) in _LAYER_DIMS:
        key, k1, k2, k3 = jax.random.split(key, 4)
        scale = 1.0 / jnp.sqrt(jnp.float32(fin))
        params["convs"].append({
            # stored already transposed: [Fin, Fout] so kernel does X @ W
            "wl": jax.random.normal(k1, (fin, fout), jnp.float32) * scale,
            "wr": jax.random.normal(k2, (fin, fout), jnp.float32) * scale,
            "bl": jax.random.normal(k3, (1, fout), jnp.float32) * scale,
        })
    key, k1, k2 = jax.random.split(key, 3)
    scale = 1.0 / jnp.sqrt(jnp.float32(128))
    params["lin_w"] = jax.random.normal(k1, (128, 1), jnp.float32) * scale
    params["lin_b"] = jax.random.normal(k2, (1, 1), jnp.float32) * scale
    return params


def pack_params(params):
    """Zero-pad + stack per-layer weights into the uniform shapes the fused
    kernel expects, and cast matmul operands to bf16 (done once, not per call)."""
    wl_all = jnp.zeros((_NUM_CONVS, _HID, _HID), jnp.float32)
    wr_all = jnp.zeros((_NUM_CONVS, _HID, _HID), jnp.float32)
    b_all = jnp.zeros((_NUM_CONVS, 1, _HID), jnp.float32)
    for l, ((fin, fout), conv) in enumerate(zip(_LAYER_DIMS, params["convs"])):
        wl_all = wl_all.at[l, :fin, :fout].set(conv["wl"])   # aggregated path
        wr_all = wr_all.at[l, :fin, :fout].set(conv["wr"])   # self path
        b_all = b_all.at[l, 0, :fout].set(conv["bl"][0])
    lin_w = jnp.zeros((_HID, _HID), jnp.float32).at[:, :1].set(params["lin_w"])
    lin_b = jnp.zeros((1, _HID), jnp.float32).at[:, :1].set(params["lin_b"])
    return {
        "wl_all": wl_all.astype(jnp.bfloat16),
        "wr_all": wr_all.astype(jnp.bfloat16),
        "b_all": b_all,                      # bias stays f32
        "lin_w": lin_w.astype(jnp.bfloat16),
        "lin_b": lin_b,                      # bias stays f32
    }


def build_agg_matrix(edge_index, num_nodes):
    """Dense mean-aggregation matrix from edge_index [2, E] (src row 0, dst row 1)."""
    src = edge_index[0]
    dst = edge_index[1]
    adj = jnp.zeros((num_nodes, num_nodes), jnp.float32).at[dst, src].add(1.0)
    deg = jnp.sum(adj, axis=1, keepdims=True)
    return adj / jnp.maximum(deg, 1.0)


# ---------------------------------------------------------------------------
# Main
# ---------------------------------------------------------------------------
if __name__ == "__main__":
    key = jax.random.PRNGKey(0)
    k_param, k_x, k_edge = jax.random.split(key, 3)

    num_nodes = 16
    num_edges = 48

    params = init_params(k_param)
    packed = pack_params(params)

    # data.x : [N, 2] node features
    x = jax.random.normal(k_x, (num_nodes, 2), jnp.float32)

    # data.edge_index : [2, E] int32 (row 0 = source, row 1 = target)
    edge_index = jax.random.randint(k_edge, (2, num_edges), 0, num_nodes, jnp.int32)

    agg = build_agg_matrix(edge_index, num_nodes)

    out = gcn_forward(packed, x, agg)   # [N, 1]
    jax.block_until_ready(out)

    assert out.shape == (num_nodes, 1)
    print("KERNEL_OK")
</pallas_src>

<mosaic_0001>
module attributes {stable_mosaic.version = 11 : i64} {
  func.func @_gcn_fused_kernel(%arg0: memref<16x16xbf16, #tpu.memory_space<vmem>>, %arg1: memref<16x128xf32, #tpu.memory_space<vmem>>, %arg2: memref<5x128x128xbf16, #tpu.memory_space<vmem>>, %arg3: memref<5x128x128xbf16, #tpu.memory_space<vmem>>, %arg4: memref<5x1x128xf32, #tpu.memory_space<vmem>>, %arg5: memref<128x128xbf16, #tpu.memory_space<vmem>>, %arg6: memref<1x128xf32, #tpu.memory_space<vmem>>, %arg7: memref<16x128xf32, #tpu.memory_space<vmem>>) attributes {dimension_semantics = [], scalar_prefetch = 0 : i64, scratch_operands = 0 : i64, tpu.core_type = #tpu.core_type<tc>} {
    %c0 = arith.constant 0 : index
    %c0_0 = arith.constant 0 : index
    %0 = vector.load %arg0[%c0, %c0_0] : memref<16x16xbf16, #tpu.memory_space<vmem>>, vector<16x16xbf16>
    %c0_1 = arith.constant 0 : index
    %c0_2 = arith.constant 0 : index
    %1 = vector.load %arg1[%c0_1, %c0_2] : memref<16x128xf32, #tpu.memory_space<vmem>>, vector<16x128xf32>
    %2 = arith.truncf %1 : vector<16x128xf32> to vector<16x128xbf16>
    %cst = arith.constant dense<0.000000e+00> : vector<16x128xf32>
    %3 = tpu.matmul %0, %2, %cst {dimension_numbers = #tpu.dot_dimension_numbers<[1], [0], [0], [1], [0, 0, 1, 1], [], []>} : vector<16x16xbf16>, vector<16x128xbf16>, vector<16x128xf32> -> vector<16x128xf32>
    %4 = arith.truncf %3 : vector<16x128xf32> to vector<16x128xbf16>
    %c0_3 = arith.constant 0 : index
    %c0_4 = arith.constant 0 : index
    %c0_5 = arith.constant 0 : index
    %5 = vector.load %arg2[%c0_3, %c0_4, %c0_5] : memref<5x128x128xbf16, #tpu.memory_space<vmem>>, vector<1x128x128xbf16>
    %6 = vector.shape_cast %5 : vector<1x128x128xbf16> to vector<128x128xbf16>
    %cst_6 = arith.constant dense<0.000000e+00> : vector<16x128xf32>
    %7 = tpu.matmul %4, %6, %cst_6 {dimension_numbers = #tpu.dot_dimension_numbers<[1], [0], [0], [1], [0, 0, 1, 1], [], []>} : vector<16x128xbf16>, vector<128x128xbf16>, vector<16x128xf32> -> vector<16x128xf32>
    %c0_7 = arith.constant 0 : index
    %c0_8 = arith.constant 0 : index
    %c0_9 = arith.constant 0 : index
    %8 = vector.load %arg3[%c0_7, %c0_8, %c0_9] : memref<5x128x128xbf16, #tpu.memory_space<vmem>>, vector<1x128x128xbf16>
    %9 = vector.shape_cast %8 : vector<1x128x128xbf16> to vector<128x128xbf16>
    %cst_10 = arith.constant dense<0.000000e+00> : vector<16x128xf32>
    %10 = tpu.matmul %2, %9, %cst_10 {dimension_numbers = #tpu.dot_dimension_numbers<[1], [0], [0], [1], [0, 0, 1, 1], [], []>} : vector<16x128xbf16>, vector<128x128xbf16>, vector<16x128xf32> -> vector<16x128xf32>
    %11 = arith.addf %7, %10 : vector<16x128xf32>
    %c0_11 = arith.constant 0 : index
    %c0_12 = arith.constant 0 : index
    %c0_13 = arith.constant 0 : index
    %12 = vector.load %arg4[%c0_11, %c0_12, %c0_13] : memref<5x1x128xf32, #tpu.memory_space<vmem>>, vector<1x1x128xf32>
    %13 = vector.shape_cast %12 : vector<1x1x128xf32> to vector<1x128xf32>
    %14 = vector.broadcast %13 : vector<1x128xf32> to vector<16x128xf32>
    %15 = arith.addf %11, %14 : vector<16x128xf32>
    %cst_14 = arith.constant 0.000000e+00 : f32
    %16 = vector.broadcast %cst_14 : f32 to vector<16x128xf32>
    %17 = arith.maximumf %15, %16 : vector<16x128xf32>
    %18 = arith.truncf %17 : vector<16x128xf32> to vector<16x128xbf16>
    %cst_15 = arith.constant dense<0.000000e+00> : vector<16x128xf32>
    %19 = tpu.matmul %0, %18, %cst_15 {dimension_numbers = #tpu.dot_dimension_numbers<[1], [0], [0], [1], [0, 0, 1, 1], [], []>} : vector<16x16xbf16>, vector<16x128xbf16>, vector<16x128xf32> -> vector<16x128xf32>
    %20 = arith.truncf %19 : vector<16x128xf32> to vector<16x128xbf16>
    %c1 = arith.constant 1 : index
    %c0_16 = arith.constant 0 : index
    %c0_17 = arith.constant 0 : index
    %21 = vector.load %arg2[%c1, %c0_16, %c0_17] : memref<5x128x128xbf16, #tpu.memory_space<vmem>>, vector<1x128x128xbf16>
    %22 = vector.shape_cast %21 : vector<1x128x128xbf16> to vector<128x128xbf16>
    %cst_18 = arith.constant dense<0.000000e+00> : vector<16x128xf32>
    %23 = tpu.matmul %20, %22, %cst_18 {dimension_numbers = #tpu.dot_dimension_numbers<[1], [0], [0], [1], [0, 0, 1, 1], [], []>} : vector<16x128xbf16>, vector<128x128xbf16>, vector<16x128xf32> -> vector<16x128xf32>
    %c1_19 = arith.constant 1 : index
    %c0_20 = arith.constant 0 : index
    %c0_21 = arith.constant 0 : index
    %24 = vector.load %arg3[%c1_19, %c0_20, %c0_21] : memref<5x128x128xbf16, #tpu.memory_space<vmem>>, vector<1x128x128xbf16>
    %25 = vector.shape_cast %24 : vector<1x128x128xbf16> to vector<128x128xbf16>
    %cst_22 = arith.constant dense<0.000000e+00> : vector<16x128xf32>
    %26 = tpu.matmul %18, %25, %cst_22 {dimension_numbers = #tpu.dot_dimension_numbers<[1], [0], [0], [1], [0, 0, 1, 1], [], []>} : vector<16x128xbf16>, vector<128x128xbf16>, vector<16x128xf32> -> vector<16x128xf32>
    %27 = arith.addf %23, %26 : vector<16x128xf32>
    %c1_23 = arith.constant 1 : index
    %c0_24 = arith.constant 0 : index
    %c0_25 = arith.constant 0 : index
    %28 = vector.load %arg4[%c1_23, %c0_24, %c0_25] : memref<5x1x128xf32, #tpu.memory_space<vmem>>, vector<1x1x128xf32>
    %29 = vector.shape_cast %28 : vector<1x1x128xf32> to vector<1x128xf32>
    %30 = vector.broadcast %29 : vector<1x128xf32> to vector<16x128xf32>
    %31 = arith.addf %27, %30 : vector<16x128xf32>
    %cst_26 = arith.constant 0.000000e+00 : f32
    %32 = vector.broadcast %cst_26 : f32 to vector<16x128xf32>
    %33 = arith.maximumf %31, %32 : vector<16x128xf32>
    %34 = arith.truncf %33 : vector<16x128xf32> to vector<16x128xbf16>
    %cst_27 = arith.constant dense<0.000000e+00> : vector<16x128xf32>
    %35 = tpu.matmul %0, %34, %cst_27 {dimension_numbers = #tpu.dot_dimension_numbers<[1], [0], [0], [1], [0, 0, 1, 1], [], []>} : vector<16x16xbf16>, vector<16x128xbf16>, vector<16x128xf32> -> vector<16x128xf32>
    %36 = arith.truncf %35 : vector<16x128xf32> to vector<16x128xbf16>
    %c2 = arith.constant 2 : index
    %c0_28 = arith.constant 0 : index
    %c0_29 = arith.constant 0 : index
    %37 = vector.load %arg2[%c2, %c0_28, %c0_29] : memref<5x128x128xbf16, #tpu.memory_space<vmem>>, vector<1x128x128xbf16>
    %38 = vector.shape_cast %37 : vector<1x128x128xbf16> to vector<128x128xbf16>
    %cst_30 = arith.constant dense<0.000000e+00> : vector<16x128xf32>
    %39 = tpu.matmul %36, %38, %cst_30 {dimension_numbers = #tpu.dot_dimension_numbers<[1], [0], [0], [1], [0, 0, 1, 1], [], []>} : vector<16x128xbf16>, vector<128x128xbf16>, vector<16x128xf32> -> vector<16x128xf32>
    %c2_31 = arith.constant 2 : index
    %c0_32 = arith.constant 0 : index
    %c0_33 = arith.constant 0 : index
    %40 = vector.load %arg3[%c2_31, %c0_32, %c0_33] : memref<5x128x128xbf16, #tpu.memory_space<vmem>>, vector<1x128x128xbf16>
    %41 = vector.shape_cast %40 : vector<1x128x128xbf16> to vector<128x128xbf16>
    %cst_34 = arith.constant dense<0.000000e+00> : vector<16x128xf32>
    %42 = tpu.matmul %34, %41, %cst_34 {dimension_numbers = #tpu.dot_dimension_numbers<[1], [0], [0], [1], [0, 0, 1, 1], [], []>} : vector<16x128xbf16>, vector<128x128xbf16>, vector<16x128xf32> -> vector<16x128xf32>
    %43 = arith.addf %39, %42 : vector<16x128xf32>
    %c2_35 = arith.constant 2 : index
    %c0_36 = arith.constant 0 : index
    %c0_37 = arith.constant 0 : index
    %44 = vector.load %arg4[%c2_35, %c0_36, %c0_37] : memref<5x1x128xf32, #tpu.memory_space<vmem>>, vector<1x1x128xf32>
    %45 = vector.shape_cast %44 : vector<1x1x128xf32> to vector<1x128xf32>
    %46 = vector.broadcast %45 : vector<1x128xf32> to vector<16x128xf32>
    %47 = arith.addf %43, %46 : vector<16x128xf32>
    %cst_38 = arith.constant 0.000000e+00 : f32
    %48 = vector.broadcast %cst_38 : f32 to vector<16x128xf32>
    %49 = arith.maximumf %47, %48 : vector<16x128xf32>
    %50 = arith.truncf %49 : vector<16x128xf32> to vector<16x128xbf16>
    %cst_39 = arith.constant dense<0.000000e+00> : vector<16x128xf32>
    %51 = tpu.matmul %0, %50, %cst_39 {dimension_numbers = #tpu.dot_dimension_numbers<[1], [0], [0], [1], [0, 0, 1, 1], [], []>} : vector<16x16xbf16>, vector<16x128xbf16>, vector<16x128xf32> -> vector<16x128xf32>
    %52 = arith.truncf %51 : vector<16x128xf32> to vector<16x128xbf16>
    %c3 = arith.constant 3 : index
    %c0_40 = arith.constant 0 : index
    %c0_41 = arith.constant 0 : index
    %53 = vector.load %arg2[%c3, %c0_40, %c0_41] : memref<5x128x128xbf16, #tpu.memory_space<vmem>>, vector<1x128x128xbf16>
    %54 = vector.shape_cast %53 : vector<1x128x128xbf16> to vector<128x128xbf16>
    %cst_42 = arith.constant dense<0.000000e+00> : vector<16x128xf32>
    %55 = tpu.matmul %52, %54, %cst_42 {dimension_numbers = #tpu.dot_dimension_numbers<[1], [0], [0], [1], [0, 0, 1, 1], [], []>} : vector<16x128xbf16>, vector<128x128xbf16>, vector<16x128xf32> -> vector<16x128xf32>
    %c3_43 = arith.constant 3 : index
    %c0_44 = arith.constant 0 : index
    %c0_45 = arith.constant 0 : index
    %56 = vector.load %arg3[%c3_43, %c0_44, %c0_45] : memref<5x128x128xbf16, #tpu.memory_space<vmem>>, vector<1x128x128xbf16>
    %57 = vector.shape_cast %56 : vector<1x128x128xbf16> to vector<128x128xbf16>
    %cst_46 = arith.constant dense<0.000000e+00> : vector<16x128xf32>
    %58 = tpu.matmul %50, %57, %cst_46 {dimension_numbers = #tpu.dot_dimension_numbers<[1], [0], [0], [1], [0, 0, 1, 1], [], []>} : vector<16x128xbf16>, vector<128x128xbf16>, vector<16x128xf32> -> vector<16x128xf32>
    %59 = arith.addf %55, %58 : vector<16x128xf32>
    %c3_47 = arith.constant 3 : index
    %c0_48 = arith.constant 0 : index
    %c0_49 = arith.constant 0 : index
    %60 = vector.load %arg4[%c3_47, %c0_48, %c0_49] : memref<5x1x128xf32, #tpu.memory_space<vmem>>, vector<1x1x128xf32>
    %61 = vector.shape_cast %60 : vector<1x1x128xf32> to vector<1x128xf32>
    %62 = vector.broadcast %61 : vector<1x128xf32> to vector<16x128xf32>
    %63 = arith.addf %59, %62 : vector<16x128xf32>
    %cst_50 = arith.constant 0.000000e+00 : f32
    %64 = vector.broadcast %cst_50 : f32 to vector<16x128xf32>
    %65 = arith.maximumf %63, %64 : vector<16x128xf32>
    %66 = arith.truncf %65 : vector<16x128xf32> to vector<16x128xbf16>
    %cst_51 = arith.constant dense<0.000000e+00> : vector<16x128xf32>
    %67 = tpu.matmul %0, %66, %cst_51 {dimension_numbers = #tpu.dot_dimension_numbers<[1], [0], [0], [1], [0, 0, 1, 1], [], []>} : vector<16x16xbf16>, vector<16x128xbf16>, vector<16x128xf32> -> vector<16x128xf32>
    %68 = arith.truncf %67 : vector<16x128xf32> to vector<16x128xbf16>
    %c4 = arith.constant 4 : index
    %c0_52 = arith.constant 0 : index
    %c0_53 = arith.constant 0 : index
    %69 = vector.load %arg2[%c4, %c0_52, %c0_53] : memref<5x128x128xbf16, #tpu.memory_space<vmem>>, vector<1x128x128xbf16>
    %70 = vector.shape_cast %69 : vector<1x128x128xbf16> to vector<128x128xbf16>
    %cst_54 = arith.constant dense<0.000000e+00> : vector<16x128xf32>
    %71 = tpu.matmul %68, %70, %cst_54 {dimension_numbers = #tpu.dot_dimension_numbers<[1], [0], [0], [1], [0, 0, 1, 1], [], []>} : vector<16x128xbf16>, vector<128x128xbf16>, vector<16x128xf32> -> vector<16x128xf32>
    %c4_55 = arith.constant 4 : index
    %c0_56 = arith.constant 0 : index
    %c0_57 = arith.constant 0 : index
    %72 = vector.load %arg3[%c4_55, %c0_56, %c0_57] : memref<5x128x128xbf16, #tpu.memory_space<vmem>>, vector<1x128x128xbf16>
    %73 = vector.shape_cast %72 : vector<1x128x128xbf16> to vector<128x128xbf16>
    %cst_58 = arith.constant dense<0.000000e+00> : vector<16x128xf32>
    %74 = tpu.matmul %66, %73, %cst_58 {dimension_numbers = #tpu.dot_dimension_numbers<[1], [0], [0], [1], [0, 0, 1, 1], [], []>} : vector<16x128xbf16>, vector<128x128xbf16>, vector<16x128xf32> -> vector<16x128xf32>
    %75 = arith.addf %71, %74 : vector<16x128xf32>
    %c4_59 = arith.constant 4 : index
    %c0_60 = arith.constant 0 : index
    %c0_61 = arith.constant 0 : index
    %76 = vector.load %arg4[%c4_59, %c0_60, %c0_61] : memref<5x1x128xf32, #tpu.memory_space<vmem>>, vector<1x1x128xf32>
    %77 = vector.shape_cast %76 : vector<1x1x128xf32> to vector<1x128xf32>
    %78 = vector.broadcast %77 : vector<1x128xf32> to vector<16x128xf32>
    %79 = arith.addf %75, %78 : vector<16x128xf32>
    %cst_62 = arith.constant 0.000000e+00 : f32
    %80 = vector.broadcast %cst_62 : f32 to vector<16x128xf32>
    %81 = arith.maximumf %79, %80 : vector<16x128xf32>
    %82 = arith.truncf %81 : vector<16x128xf32> to vector<16x128xbf16>
    %c0_63 = arith.constant 0 : index
    %c0_64 = arith.constant 0 : index
    %83 = vector.load %arg5[%c0_63, %c0_64] : memref<128x128xbf16, #tpu.memory_space<vmem>>, vector<128x128xbf16>
    %cst_65 = arith.constant dense<0.000000e+00> : vector<16x128xf32>
    %84 = tpu.matmul %82, %83, %cst_65 {dimension_numbers = #tpu.dot_dimension_numbers<[1], [0], [0], [1], [0, 0, 1, 1], [], []>} : vector<16x128xbf16>, vector<128x128xbf16>, vector<16x128xf32> -> vector<16x128xf32>
    %c0_66 = arith.constant 0 : index
    %c0_67 = arith.constant 0 : index
    %85 = vector.load %arg6[%c0_66, %c0_67] : memref<1x128xf32, #tpu.memory_space<vmem>>, vector<1x128xf32>
    %86 = vector.broadcast %85 : vector<1x128xf32> to vector<16x128xf32>
    %87 = arith.addf %84, %86 : vector<16x128xf32>
    %c0_68 = arith.constant 0 : index
    %c0_69 = arith.constant 0 : index
    %88 = vector.load %arg7[%c0_68, %c0_69] : memref<16x128xf32, #tpu.memory_space<vmem>>, vector<16x128xf32>
    tpu.vector_store %arg7[%c0_68, %c0_69], %87 {strides = array<i32>} : memref<16x128xf32, #tpu.memory_space<vmem>>, vector<16x128xf32>,
    return
  }
}

</mosaic_0001>

<llo_original>
// kernel: tpu_custom_call.1
$region0: #{tpu_custom_call.1}
  #allocation0 [shape = 'u32[]', space=smem, size = 0x4, offset = 0x4, fixed_abs, tag = 'smem constant byte address 0x4 - core index']
  #allocation1 [shape = 'u32[144,128]{1,0:T(1,128)}', space=vmem, size = 0x12000, scoped, tag = 'internal scratch']
  %s0 = inlined_call_operand.hbm [shape: bf16[16,16], index: 0, kind: input, shape index: {}]
  %s1 = inlined_call_operand.hbm [shape: f32[16,128], index: 1, kind: input, shape index: {}]
  %s2 = inlined_call_operand.hbm [shape: bf16[5,128,128], index: 2, kind: input, shape index: {}]
  %s3 = inlined_call_operand.hbm [shape: bf16[5,128,128], index: 3, kind: input, shape index: {}]
  %s4 = inlined_call_operand.vmem [shape: f32[5,1,128], index: 4, kind: input, shape index: {}]
  %s5 = inlined_call_operand.hbm [shape: bf16[128,128], index: 5, kind: input, shape index: {}]
  %s6 = inlined_call_operand.vmem [shape: f32[1,128], index: 6, kind: input, shape index: {}]
  %s7 = inlined_call_operand.hbm [shape: f32[16,128], index: 7, kind: output, shape index: {}]
  %s8 = sld [smem:[#allocation0]]
  $region58: #{tpu_custom_call.1} parent=0
    _
  %s10 = ssub.s32 1, %s8
  %s11 = scalar_select 0, %s10, %s8
  $region1: #{tpu_custom_call.1} parent=0
    #allocation2 [shape = 'u8[4096]{0}', space=vmem, size = 0x1000, scoped, tag = 'input window, operand 0, single buffered']
    #allocation3 [shape = 's32[1]{0}', space=sflag, size = 0x4, scoped, tag = 'scoped memory for tpu_custom_call.1']
    #allocation4 [shape = 's32[1]{0}', space=sflag, size = 0x4, scoped, tag = 'scoped memory for tpu_custom_call.1']
    #allocation5 [shape = 'u8[8192]{0}', space=vmem, size = 0x2000, scoped, tag = 'input window, operand 1, single buffered']
    #allocation6 [shape = 's32[1]{0}', space=sflag, size = 0x4, scoped, tag = 'scoped memory for tpu_custom_call.1']
    #allocation7 [shape = 'u8[163840]{0}', space=vmem, size = 0x28000, scoped, tag = 'input window, operand 2, single buffered']
    #allocation8 [shape = 'u8[163840]{0}', space=vmem, size = 0x28000, scoped, tag = 'input window, operand 3, single buffered']
    #allocation9 [shape = 's32[1]{0}', space=sflag, size = 0x4, scoped, tag = 'scoped memory for tpu_custom_call.1']
    #allocation10 [shape = 'u8[32768]{0}', space=vmem, size = 0x8000, scoped, tag = 'input window, operand 5, single buffered']
    #allocation11 [shape = 'u8[8192]{0}', space=vmem, size = 0x2000, scoped, tag = 'output window, operand 0, single buffered']
    %12 = vsyncpa [#allocation3], 0
    %13 = vsyncpa [#allocation6], 0
    %14 = vsyncpa [#allocation9], 0
    %15 = vsyncpa [#allocation4], 0
    // Predicated region
    $region2: #{tpu_custom_call.1} parent=1 // pred_check
      _
    $region3: #{tpu_custom_call.1} parent=1 // pred_check_branch
      %17 = sbr.rel (0) target = $region5
    $region4: #{tpu_custom_call.1} parent=1 // pred_region
      %s19 = ssub.s32 128, 128
      %20 = vsyncadd [#allocation3], %s19
      %s21 = sshll.u32 [#allocation2], 4
      %s22 = int_to_ptr.vmem [resolvable:$true] %s21
      %27 = dma.hbm_to_vmem [thread:$0]  %s0, 128, %s22, [#allocation3], 64, 64, 4
    $region5: #{tpu_custom_call.1} parent=1 // pred_fallthru
      _
    // Predicated region
    $region6: #{tpu_custom_call.1} parent=1 // pred_check
      _
    $region7: #{tpu_custom_call.1} parent=1 // pred_check_branch
      %29 = sbr.rel (0) target = $region9
    $region8: #{tpu_custom_call.1} parent=1 // pred_region
      %s31 = ssub.s32 256, 256
      %32 = vsyncadd [#allocation6], %s31
      %s33 = sshll.u32 [#allocation5], 4
      %s34 = int_to_ptr.vmem [resolvable:$true] %s33
      %39 = dma.hbm_to_vmem [thread:$0]  %s1, 256, %s34, [#allocation6], 128, 128, 8
    $region9: #{tpu_custom_call.1} parent=1 // pred_fallthru
      _
    // Predicated region
    $region10: #{tpu_custom_call.1} parent=1 // pred_check
      _
    $region11: #{tpu_custom_call.1} parent=1 // pred_check_branch
      %41 = sbr.rel (0) target = $region13
    $region12: #{tpu_custom_call.1} parent=1 // pred_region
      %s43 = ssub.s32 5120, 5120
      %44 = vsyncadd [#allocation6], %s43
      %s45 = sshll.u32 [#allocation7], 4
      %s46 = int_to_ptr.vmem [resolvable:$true] %s45
      %51 = dma.hbm_to_vmem [thread:$0]  %s2, 5120, %s46, [#allocation6], 64, 64, 4
    $region13: #{tpu_custom_call.1} parent=1 // pred_fallthru
      _
    // Predicated region
    $region14: #{tpu_custom_call.1} parent=1 // pred_check
      _
    $region15: #{tpu_custom_call.1} parent=1 // pred_check_branch
      %53 = sbr.rel (0) target = $region17
    $region16: #{tpu_custom_call.1} parent=1 // pred_region
      %s55 = ssub.s32 5120, 5120
      %56 = vsyncadd [#allocation9], %s55
      %s57 = sshll.u32 [#allocation8], 4
      %s58 = int_to_ptr.vmem [resolvable:$true] %s57
      %63 = dma.hbm_to_vmem [thread:$0]  %s3, 5120, %s58, [#allocation9], 64, 64, 4
    $region17: #{tpu_custom_call.1} parent=1 // pred_fallthru
      _
    // Predicated region
    $region18: #{tpu_custom_call.1} parent=1 // pred_check
      _
    $region19: #{tpu_custom_call.1} parent=1 // pred_check_branch
      %65 = sbr.rel (0) target = $region21
    $region20: #{tpu_custom_call.1} parent=1 // pred_region
      _
    $region21: #{tpu_custom_call.1} parent=1 // pred_fallthru
      _
    // Predicated region
    $region22: #{tpu_custom_call.1} parent=1 // pred_check
      _
    $region23: #{tpu_custom_call.1} parent=1 // pred_check_branch
      %67 = sbr.rel (0) target = $region25
    $region24: #{tpu_custom_call.1} parent=1 // pred_region
      %s69 = ssub.s32 1024, 1024
      %70 = vsyncadd [#allocation9], %s69
      %s71 = sshll.u32 [#allocation10], 4
      %s72 = int_to_ptr.vmem [resolvable:$true] %s71
      %77 = dma.hbm_to_vmem [thread:$0]  %s5, 1024, %s72, [#allocation9], 64, 64, 4
    $region25: #{tpu_custom_call.1} parent=1 // pred_fallthru
      _
    // Predicated region
    $region26: #{tpu_custom_call.1} parent=1 // pred_check
      _
    $region27: #{tpu_custom_call.1} parent=1 // pred_check_branch
      %79 = sbr.rel (0) target = $region29
    $region28: #{tpu_custom_call.1} parent=1 // pred_region
      _
    $region29: #{tpu_custom_call.1} parent=1 // pred_fallthru
      _
    // Predicated region
    $region30: #{tpu_custom_call.1} parent=1 // pred_check
      _
    $region31: #{tpu_custom_call.1} parent=1 // pred_check_branch
      %81 = sbr.rel (0) target = $region33
    $region32: #{tpu_custom_call.1} parent=1 // pred_region
      %82 = dma.done [#allocation3], 128
    $region33: #{tpu_custom_call.1} parent=1 // pred_fallthru
      _
    // Predicated region
    $region34: #{tpu_custom_call.1} parent=1 // pred_check
      _
    $region35: #{tpu_custom_call.1} parent=1 // pred_check_branch
      %84 = sbr.rel (0) target = $region37
    $region36: #{tpu_custom_call.1} parent=1 // pred_region
      %85 = dma.done [#allocation6], 256
    $region37: #{tpu_custom_call.1} parent=1 // pred_fallthru
      _
    // Predicated region
    $region38: #{tpu_custom_call.1} parent=1 // pred_check
      _
    $region39: #{tpu_custom_call.1} parent=1 // pred_check_branch
      %87 = sbr.rel (0) target = $region41
    $region40: #{tpu_custom_call.1} parent=1 // pred_region
      %88 = dma.done [#allocation6], 5120
    $region41: #{tpu_custom_call.1} parent=1 // pred_fallthru
      _
    // Predicated region
    $region42: #{tpu_custom_call.1} parent=1 // pred_check
      _
    $region43: #{tpu_custom_call.1} parent=1 // pred_check_branch
      %90 = sbr.rel (0) target = $region45
    $region44: #{tpu_custom_call.1} parent=1 // pred_region
      %91 = dma.done [#allocation9], 5120
    $region45: #{tpu_custom_call.1} parent=1 // pred_fallthru
      _
    // Predicated region
    $region46: #{tpu_custom_call.1} parent=1 // pred_check
      _
    $region47: #{tpu_custom_call.1} parent=1 // pred_check_branch
      %93 = sbr.rel (0) target = $region49
    $region48: #{tpu_custom_call.1} parent=1 // pred_region
      %94 = dma.done [#allocation9], 1024
    $region49: #{tpu_custom_call.1} parent=1 // pred_fallthru
      _
    %v96 = vld [vmem:[#allocation2] sm:$0xf]
    %v97 = vld [vmem:[#allocation2 + $0x4] sm:$0xf]
    %v98 = vld [vmem:[#allocation5] sm:$0xff]
    %v99 = vld [vmem:[#allocation5 + $0x8] sm:$0xff]
    %v100 = vpack.c.bf16 %v99, %v98
    %v103 = vunpack.c.l.b16 %v96
    %v104 = vunpack.c.l.b16 %v97
    %v105 = vpack.c.b16 %v104, %v103
    %vm106 = vcmask 130048
    %v108 = vsel %vm106, %v105, 0
    %110 = vmatprep.subr.bf16.mxu0 0
    %111 = vmatpush1.bf16.msra.mxu0 0
    %112 = vmatprep.subr.bf16.mxu0 0
    %113 = vmatpush1.bf16.msra.mxu0 0
    %114 = vmatprep.subr.bf16.mxu0 0
    %115 = vmatpush1.bf16.msra.mxu0 0
    %116 = vmatprep.subr.bf16.mxu0 0
    %117 = vmatpush1.bf16.msra.mxu0 0
    %118 = vmatprep.subr.bf16.mxu0 0
    %119 = vmatpush1.bf16.msra.mxu0 0
    %120 = vmatprep.subr.bf16.mxu0 0
    %121 = vmatpush1.bf16.msra.mxu0 0
    %122 = vmatprep.subr.bf16.mxu0 0
    %123 = vmatpush1.bf16.msra.mxu0 0
    %124 = vmatprep.subr.bf16.mxu0 0
    %125 = vmatpush1.bf16.msra.mxu0 %v100
    %126 = vmatprep.subr.bf16.mxu0 0
    %127 = vmatpush2.bf16.msra.mxu0 0
    %128 = vmatprep.subr.bf16.mxu0 0
    %129 = vmatpush2.bf16.msra.mxu0 0
    %130 = vmatprep.subr.bf16.mxu0 0
    %131 = vmatpush2.bf16.msra.mxu0 0
    %132 = vmatprep.subr.bf16.mxu0 0
    %133 = vmatpush2.bf16.msra.mxu0 0
    %134 = vmatprep.subr.bf16.mxu0 0
    %135 = vmatpush2.bf16.msra.mxu0 0
    %136 = vmatprep.subr.bf16.mxu0 0
    %137 = vmatpush2.bf16.msra.mxu0 0
    %138 = vmatprep.subr.bf16.mxu0 0
    %139 = vmatpush2.bf16.msra.mxu0 0
    %140 = vmatprep.subr.bf16.mxu0 0
    %141 = vmatpush2.bf16.msra.mxu0 0
    %142 = vmatprep.mubr.bf16.mxu0 0
    %143 = vmatmul.mubr.bf16.gmra.mxu0 %v108
    %v144 = vpop.f32.mrf.mxu0
    %v145 = vadd.f32 0.0, %v144
    %v146 = vpop.f32.mrf.mxu0
    %v147 = vpop.f32.mrf.mxu0
    %v148 = vadd.f32 0.0, %v147
    %v149 = vpop.f32.mrf.mxu0
    %150 = vdwg.mxu0
    %v151 = vpack.c.bf16 %v148, %v145
    %v152 = vld [vmem:[#allocation7] sm:$0xf]
    %v153 = vld [vmem:[#allocation7 + $0x4] sm:$0xf]
    %v154 = vld [vmem:[#allocation7 + $0x8] sm:$0xf]
    %v155 = vld [vmem:[#allocation7 + $0xc] sm:$0xf]
    %v156 = vld [vmem:[#allocation7 + $0x10] sm:$0xf]
    %v157 = vld [vmem:[#allocation7 + $0x14] sm:$0xf]
    %v158 = vld [vmem:[#allocation7 + $0x18] sm:$0xf]
    %v159 = vld [vmem:[#allocation7 + $0x1c] sm:$0xf]
    %v160 = vld [vmem:[#allocation7 + $0x20] sm:$0xf]
    %v161 = vld [vmem:[#allocation7 + $0x24] sm:$0xf]
    %v162 = vld [vmem:[#allocation7 + $0x28] sm:$0xf]
    %v163 = vld [vmem:[#allocation7 + $0x2c] sm:$0xf]
    %v164 = vld [vmem:[#allocation7 + $0x30] sm:$0xf]
    %v165 = vld [vmem:[#allocation7 + $0x34] sm:$0xf]
    %v166 = vld [vmem:[#allocation7 + $0x38] sm:$0xf]
    %v167 = vld [vmem:[#allocation7 + $0x3c] sm:$0xf]
    %v168 = vld [vmem:[#allocation8] sm:$0xf]
    %v169 = vld [vmem:[#allocation8 + $0x4] sm:$0xf]
    %v170 = vld [vmem:[#allocation8 + $0x8] sm:$0xf]
    %v171 = vld [vmem:[#allocation8 + $0xc] sm:$0xf]
    %v172 = vld [vmem:[#allocation8 + $0x10] sm:$0xf]
    %v173 = vld [vmem:[#allocation8 + $0x14] sm:$0xf]
    %v174 = vld [vmem:[#allocation8 + $0x18] sm:$0xf]
    %v175 = vld [vmem:[#allocation8 + $0x1c] sm:$0xf]
    %v176 = vld [vmem:[#allocation8 + $0x20] sm:$0xf]
    %v177 = vld [vmem:[#allocation8 + $0x24] sm:$0xf]
    %v178 = vld [vmem:[#allocation8 + $0x28] sm:$0xf]
    %v179 = vld [vmem:[#allocation8 + $0x2c] sm:$0xf]
    %v180 = vld [vmem:[#allocation8 + $0x30] sm:$0xf]
    %v181 = vld [vmem:[#allocation8 + $0x34] sm:$0xf]
    %v182 = vld [vmem:[#allocation8 + $0x38] sm:$0xf]
    %v183 = vld [vmem:[#allocation8 + $0x3c] sm:$0xf]
    %v200 = vunpack.c.l.b16 %v168
    %v201 = vunpack.c.l.b16 %v169
    %v202 = vunpack.c.l.b16 %v170
    %v203 = vunpack.c.l.b16 %v171
    %v204 = vunpack.c.l.b16 %v172
    %v205 = vunpack.c.l.b16 %v173
    %v206 = vunpack.c.l.b16 %v174
    %v207 = vunpack.c.l.b16 %v175
    %v208 = vunpack.c.l.b16 %v176
    %v209 = vunpack.c.l.b16 %v177
    %v210 = vunpack.c.l.b16 %v178
    %v211 = vunpack.c.l.b16 %v179
    %v212 = vunpack.c.l.b16 %v180
    %v213 = vunpack.c.l.b16 %v181
    %v214 = vunpack.c.l.b16 %v182
    %v215 = vunpack.c.l.b16 %v183
    %v216 = vpack.c.b16 %v201, %v200
    %v217 = vpack.c.b16 %v203, %v202
    %v218 = vpack.c.b16 %v205, %v204
    %v219 = vpack.c.b16 %v207, %v206
    %v220 = vpack.c.b16 %v209, %v208
    %v221 = vpack.c.b16 %v211, %v210
    %v222 = vpack.c.b16 %v213, %v212
    %v223 = vpack.c.b16 %v215, %v214
    %232 = vmatprep.subr.bf16.mxu0 0
    %233 = vmatpush1.bf16.msra.mxu0 %v223
    %234 = vmatprep.subr.bf16.mxu0 0
    %235 = vmatpush1.bf16.msra.mxu0 %v222
    %236 = vmatprep.subr.bf16.mxu0 0
    %237 = vmatpush1.bf16.msra.mxu0 %v221
    %238 = vmatprep.subr.bf16.mxu0 0
    %239 = vmatpush1.bf16.msra.mxu0 %v220
    %240 = vmatprep.subr.bf16.mxu0 0
    %241 = vmatpush1.bf16.msra.mxu0 %v219
    %242 = vmatprep.subr.bf16.mxu0 0
    %243 = vmatpush1.bf16.msra.mxu0 %v218
    %244 = vmatprep.subr.bf16.mxu0 0
    %245 = vmatpush1.bf16.msra.mxu0 %v217
    %246 = vmatprep.subr.bf16.mxu0 0
    %247 = vmatpush1.bf16.msra.mxu0 %v216
    %248 = vmatprep.subr.bf16.mxu0 0
    %249 = vmatpush2.bf16.msra.mxu0 0
    %250 = vmatprep.subr.bf16.mxu0 0
    %251 = vmatpush2.bf16.msra.mxu0 0
    %252 = vmatprep.subr.bf16.mxu0 0
    %253 = vmatpush2.bf16.msra.mxu0 0
    %254 = vmatprep.subr.bf16.mxu0 0
    %255 = vmatpush2.bf16.msra.mxu0 0
    %256 = vmatprep.subr.bf16.mxu0 0
    %257 = vmatpush2.bf16.msra.mxu0 0
    %258 = vmatprep.subr.bf16.mxu0 0
    %259 = vmatpush2.bf16.msra.mxu0 0
    %260 = vmatprep.subr.bf16.mxu0 0
    %261 = vmatpush2.bf16.msra.mxu0 0
    %262 = vmatprep.subr.bf16.mxu0 0
    %263 = vmatpush2.bf16.msra.mxu0 0
    %264 = vmatprep.mubr.bf16.mxu0 0
    %265 = vmatmul.mubr.bf16.gmra.mxu0 %v100
    %v266 = vpop.f32.mrf.mxu0
    %v267 = vadd.f32 0.0, %v266
    %v268 = vpop.f32.mrf.mxu0
    %v269 = vpop.f32.mrf.mxu0
    %v270 = vadd.f32 0.0, %v269
    %v271 = vpop.f32.mrf.mxu0
    %272 = vdwg.mxu0
    %v289 = vunpack.c.l.b16 %v152
    %v290 = vunpack.c.l.b16 %v153
    %v291 = vunpack.c.l.b16 %v154
    %v292 = vunpack.c.l.b16 %v155
    %v293 = vunpack.c.l.b16 %v156
    %v294 = vunpack.c.l.b16 %v157
    %v295 = vunpack.c.l.b16 %v158
    %v296 = vunpack.c.l.b16 %v159
    %v297 = vunpack.c.l.b16 %v160
    %v298 = vunpack.c.l.b16 %v161
    %v299 = vunpack.c.l.b16 %v162
    %v300 = vunpack.c.l.b16 %v163
    %v301 = vunpack.c.l.b16 %v164
    %v302 = vunpack.c.l.b16 %v165
    %v303 = vunpack.c.l.b16 %v166
    %v304 = vunpack.c.l.b16 %v167
    %v305 = vpack.c.b16 %v290, %v289
    %v306 = vpack.c.b16 %v292, %v291
    %v307 = vpack.c.b16 %v294, %v293
    %v308 = vpack.c.b16 %v296, %v295
    %v309 = vpack.c.b16 %v298, %v297
    %v310 = vpack.c.b16 %v300, %v299
    %v311 = vpack.c.b16 %v302, %v301
    %v312 = vpack.c.b16 %v304, %v303
    %321 = vmatprep.subr.bf16.mxu0 0
    %322 = vmatpush1.bf16.msra.mxu0 %v312
    %323 = vmatprep.subr.bf16.mxu0 0
    %324 = vmatpush1.bf16.msra.mxu0 %v311
    %325 = vmatprep.subr.bf16.mxu0 0
    %326 = vmatpush1.bf16.msra.mxu0 %v310
    %327 = vmatprep.subr.bf16.mxu0 0
    %328 = vmatpush1.bf16.msra.mxu0 %v309
    %329 = vmatprep.subr.bf16.mxu0 0
    %330 = vmatpush1.bf16.msra.mxu0 %v308
    %331 = vmatprep.subr.bf16.mxu0 0
    %332 = vmatpush1.bf16.msra.mxu0 %v307
    %333 = vmatprep.subr.bf16.mxu0 0
    %334 = vmatpush1.bf16.msra.mxu0 %v306
    %335 = vmatprep.subr.bf16.mxu0 0
    %336 = vmatpush1.bf16.msra.mxu0 %v305
    %337 = vmatprep.subr.bf16.mxu0 0
    %338 = vmatpush2.bf16.msra.mxu0 0
    %339 = vmatprep.subr.bf16.mxu0 0
    %340 = vmatpush2.bf16.msra.mxu0 0
    %341 = vmatprep.subr.bf16.mxu0 0
    %342 = vmatpush2.bf16.msra.mxu0 0
    %343 = vmatprep.subr.bf16.mxu0 0
    %344 = vmatpush2.bf16.msra.mxu0 0
    %345 = vmatprep.subr.bf16.mxu0 0
    %346 = vmatpush2.bf16.msra.mxu0 0
    %347 = vmatprep.subr.bf16.mxu0 0
    %348 = vmatpush2.bf16.msra.mxu0 0
    %349 = vmatprep.subr.bf16.mxu0 0
    %350 = vmatpush2.bf16.msra.mxu0 0
    %351 = vmatprep.subr.bf16.mxu0 0
    %352 = vmatpush2.bf16.msra.mxu0 0
    %353 = vmatprep.mubr.bf16.mxu0 0
    %354 = vmatmul.mubr.bf16.gmra.mxu0 %v151
    %v355 = vpop.f32.mrf.mxu0
    %v356 = vadd.f32 %v267, %v355
    %v357 = vpop.f32.mrf.mxu0
    %v358 = vpop.f32.mrf.mxu0
    %v359 = vadd.f32 %v270, %v358
    %v360 = vpop.f32.mrf.mxu0
    %361 = vdwg.mxu0
    %v362 = vld [vmem:[%s4] sm:$0x1]
    %v364 = vlaneseq
    %v365 = vshrl.u32 %v364, 7
    %v366 = vsub.s32 0, %v365
    %v367 = vrot.slane %v362, %v366
    %v369 = vadd.f32 %v356, %v367
    %v370 = vadd.f32 %v359, %v367
    %v371 = vmax.f32 %v369, 0.0
    %v372 = vmax.f32 %v370, 0.0
    %v373 = vpack.c.bf16 %v372, %v371
    %374 = vmatprep.subr.bf16.mxu0 0
    %375 = vmatpush1.bf16.msra.mxu0 0
    %376 = vmatprep.subr.bf16.mxu0 0
    %377 = vmatpush1.bf16.msra.mxu0 0
    %378 = vmatprep.subr.bf16.mxu0 0
    %379 = vmatpush1.bf16.msra.mxu0 0
    %380 = vmatprep.subr.bf16.mxu0 0
    %381 = vmatpush1.bf16.msra.mxu0 0
    %382 = vmatprep.subr.bf16.mxu0 0
    %383 = vmatpush1.bf16.msra.mxu0 0
    %384 = vmatprep.subr.bf16.mxu0 0
    %385 = vmatpush1.bf16.msra.mxu0 0
    %386 = vmatprep.subr.bf16.mxu0 0
    %387 = vmatpush1.bf16.msra.mxu0 0
    %388 = vmatprep.subr.bf16.mxu0 0
    %389 = vmatpush1.bf16.msra.mxu0 %v373
    %390 = vmatprep.subr.bf16.mxu0 0
    %391 = vmatpush2.bf16.msra.mxu0 0
    %392 = vmatprep.subr.bf16.mxu0 0
    %393 = vmatpush2.bf16.msra.mxu0 0
    %394 = vmatprep.subr.bf16.mxu0 0
    %395 = vmatpush2.bf16.msra.mxu0 0
    %396 = vmatprep.subr.bf16.mxu0 0
    %397 = vmatpush2.bf16.msra.mxu0 0
    %398 = vmatprep.subr.bf16.mxu0 0
    %399 = vmatpush2.bf16.msra.mxu0 0
    %400 = vmatprep.subr.bf16.mxu0 0
    %401 = vmatpush2.bf16.msra.mxu0 0
    %402 = vmatprep.subr.bf16.mxu0 0
    %403 = vmatpush2.bf16.msra.mxu0 0
    %404 = vmatprep.subr.bf16.mxu0 0
    %405 = vmatpush2.bf16.msra.mxu0 0
    %406 = vmatprep.mubr.bf16.mxu0 0
    %407 = vmatmul.mubr.bf16.gmra.mxu0 %v108
    %v408 = vpop.f32.mrf.mxu0
    %v409 = vadd.f32 0.0, %v408
    %v410 = vpop.f32.mrf.mxu0
    %v411 = vpop.f32.mrf.mxu0
    %v412 = vadd.f32 0.0, %v411
    %v413 = vpop.f32.mrf.mxu0
    %414 = vdwg.mxu0
    %v415 = vpack.c.bf16 %v412, %v409
    %s416 = scalar_lea.vmem [#allocation7], 64
    %v417 = vld [vmem:[%s416] sm:$0xf]
    %v418 = vld [vmem:[%s416 + $0x4] sm:$0xf]
    %v419 = vld [vmem:[%s416 + $0x8] sm:$0xf]
    %v420 = vld [vmem:[%s416 + $0xc] sm:$0xf]
    %v421 = vld [vmem:[%s416 + $0x10] sm:$0xf]
    %v422 = vld [vmem:[%s416 + $0x14] sm:$0xf]
    %v423 = vld [vmem:[%s416 + $0x18] sm:$0xf]
    %v424 = vld [vmem:[%s416 + $0x1c] sm:$0xf]
    %v425 = vld [vmem:[%s416 + $0x20] sm:$0xf]
    %v426 = vld [vmem:[%s416 + $0x24] sm:$0xf]
    %v427 = vld [vmem:[%s416 + $0x28] sm:$0xf]
    %v428 = vld [vmem:[%s416 + $0x2c] sm:$0xf]
    %v429 = vld [vmem:[%s416 + $0x30] sm:$0xf]
    %v430 = vld [vmem:[%s416 + $0x34] sm:$0xf]
    %v431 = vld [vmem:[%s416 + $0x38] sm:$0xf]
    %v432 = vld [vmem:[%s416 + $0x3c] sm:$0xf]
    %s433 = scalar_lea.vmem [#allocation8], 64
    %v434 = vld [vmem:[%s433] sm:$0xf]
    %v435 = vld [vmem:[%s433 + $0x4] sm:$0xf]
    %v436 = vld [vmem:[%s433 + $0x8] sm:$0xf]
    %v437 = vld [vmem:[%s433 + $0xc] sm:$0xf]
    %v438 = vld [vmem:[%s433 + $0x10] sm:$0xf]
    %v439 = vld [vmem:[%s433 + $0x14] sm:$0xf]
    %v440 = vld [vmem:[%s433 + $0x18] sm:$0xf]
    %v441 = vld [vmem:[%s433 + $0x1c] sm:$0xf]
    %v442 = vld [vmem:[%s433 + $0x20] sm:$0xf]
    %v443 = vld [vmem:[%s433 + $0x24] sm:$0xf]
    %v444 = vld [vmem:[%s433 + $0x28] sm:$0xf]
    %v445 = vld [vmem:[%s433 + $0x2c] sm:$0xf]
    %v446 = vld [vmem:[%s433 + $0x30] sm:$0xf]
    %v447 = vld [vmem:[%s433 + $0x34] sm:$0xf]
    %v448 = vld [vmem:[%s433 + $0x38] sm:$0xf]
    %v449 = vld [vmem:[%s433 + $0x3c] sm:$0xf]
    %v466 = vunpack.c.l.b16 %v434
    %v467 = vunpack.c.l.b16 %v435
    %v468 = vunpack.c.l.b16 %v436
    %v469 = vunpack.c.l.b16 %v437
    %v470 = vunpack.c.l.b16 %v438
    %v471 = vunpack.c.l.b16 %v439
    %v472 = vunpack.c.l.b16 %v440
    %v473 = vunpack.c.l.b16 %v441
    %v474 = vunpack.c.l.b16 %v442
    %v475 = vunpack.c.l.b16 %v443
    %v476 = vunpack.c.l.b16 %v444
    %v477 = vunpack.c.l.b16 %v445
    %v478 = vunpack.c.l.b16 %v446
    %v479 = vunpack.c.l.b16 %v447
    %v480 = vunpack.c.l.b16 %v448
    %v481 = vunpack.c.l.b16 %v449
    %v482 = vpack.c.b16 %v467, %v466
    %v483 = vpack.c.b16 %v469, %v468
    %v484 = vpack.c.b16 %v471, %v470
    %v485 = vpack.c.b16 %v473, %v472
    %v486 = vpack.c.b16 %v475, %v474
    %v487 = vpack.c.b16 %v477, %v476
    %v488 = vpack.c.b16 %v479, %v478
    %v489 = vpack.c.b16 %v481, %v480
    %498 = vmatprep.subr.bf16.mxu0 0
    %499 = vmatpush1.bf16.msra.mxu0 %v489
    %500 = vmatprep.subr.bf16.mxu0 0
    %501 = vmatpush1.bf16.msra.mxu0 %v488
    %502 = vmatprep.subr.bf16.mxu0 0
    %503 = vmatpush1.bf16.msra.mxu0 %v487
    %504 = vmatprep.subr.bf16.mxu0 0
    %505 = vmatpush1.bf16.msra.mxu0 %v486
    %506 = vmatprep.subr.bf16.mxu0 0
    %507 = vmatpush1.bf16.msra.mxu0 %v485
    %508 = vmatprep.subr.bf16.mxu0 0
    %509 = vmatpush1.bf16.msra.mxu0 %v484
    %510 = vmatprep.subr.bf16.mxu0 0
    %511 = vmatpush1.bf16.msra.mxu0 %v483
    %512 = vmatprep.subr.bf16.mxu0 0
    %513 = vmatpush1.bf16.msra.mxu0 %v482
    %514 = vmatprep.subr.bf16.mxu0 0
    %515 = vmatpush2.bf16.msra.mxu0 0
    %516 = vmatprep.subr.bf16.mxu0 0
    %517 = vmatpush2.bf16.msra.mxu0 0
    %518 = vmatprep.subr.bf16.mxu0 0
    %519 = vmatpush2.bf16.msra.mxu0 0
    %520 = vmatprep.subr.bf16.mxu0 0
    %521 = vmatpush2.bf16.msra.mxu0 0
    %522 = vmatprep.subr.bf16.mxu0 0
    %523 = vmatpush2.bf16.msra.mxu0 0
    %524 = vmatprep.subr.bf16.mxu0 0
    %525 = vmatpush2.bf16.msra.mxu0 0
    %526 = vmatprep.subr.bf16.mxu0 0
    %527 = vmatpush2.bf16.msra.mxu0 0
    %528 = vmatprep.subr.bf16.mxu0 0
    %529 = vmatpush2.bf16.msra.mxu0 0
    %530 = vmatprep.mubr.bf16.mxu0 0
    %531 = vmatmul.mubr.bf16.gmra.mxu0 %v373
    %v532 = vpop.f32.mrf.mxu0
    %v533 = vadd.f32 0.0, %v532
    %v534 = vpop.f32.mrf.mxu0
    %v535 = vpop.f32.mrf.mxu0
    %v536 = vadd.f32 0.0, %v535
    %v537 = vpop.f32.mrf.mxu0
    %538 = vdwg.mxu0
    %v555 = vunpack.c.l.b16 %v417
    %v556 = vunpack.c.l.b16 %v418
    %v557 = vunpack.c.l.b16 %v419
    %v558 = vunpack.c.l.b16 %v420
    %v559 = vunpack.c.l.b16 %v421
    %v560 = vunpack.c.l.b16 %v422
    %v561 = vunpack.c.l.b16 %v423
    %v562 = vunpack.c.l.b16 %v424
    %v563 = vunpack.c.l.b16 %v425
    %v564 = vunpack.c.l.b16 %v426
    %v565 = vunpack.c.l.b16 %v427
    %v566 = vunpack.c.l.b16 %v428
    %v567 = vunpack.c.l.b16 %v429
    %v568 = vunpack.c.l.b16 %v430
    %v569 = vunpack.c.l.b16 %v431
    %v570 = vunpack.c.l.b16 %v432
    %v571 = vpack.c.b16 %v556, %v555
    %v572 = vpack.c.b16 %v558, %v557
    %v573 = vpack.c.b16 %v560, %v559
    %v574 = vpack.c.b16 %v562, %v561
    %v575 = vpack.c.b16 %v564, %v563
    %v576 = vpack.c.b16 %v566, %v565
    %v577 = vpack.c.b16 %v568, %v567
    %v578 = vpack.c.b16 %v570, %v569
    %587 = vmatprep.subr.bf16.mxu0 0
    %588 = vmatpush1.bf16.msra.mxu0 %v578
    %589 = vmatprep.subr.bf16.mxu0 0
    %590 = vmatpush1.bf16.msra.mxu0 %v577
    %591 = vmatprep.subr.bf16.mxu0 0
    %592 = vmatpush1.bf16.msra.mxu0 %v576
    %593 = vmatprep.subr.bf16.mxu0 0
    %594 = vmatpush1.bf16.msra.mxu0 %v575
    %595 = vmatprep.subr.bf16.mxu0 0
    %596 = vmatpush1.bf16.msra.mxu0 %v574
    %597 = vmatprep.subr.bf16.mxu0 0
    %598 = vmatpush1.bf16.msra.mxu0 %v573
    %599 = vmatprep.subr.bf16.mxu0 0
    %600 = vmatpush1.bf16.msra.mxu0 %v572
    %601 = vmatprep.subr.bf16.mxu0 0
    %602 = vmatpush1.bf16.msra.mxu0 %v571
    %603 = vmatprep.subr.bf16.mxu0 0
    %604 = vmatpush2.bf16.msra.mxu0 0
    %605 = vmatprep.subr.bf16.mxu0 0
    %606 = vmatpush2.bf16.msra.mxu0 0
    %607 = vmatprep.subr.bf16.mxu0 0
    %608 = vmatpush2.bf16.msra.mxu0 0
    %609 = vmatprep.subr.bf16.mxu0 0
    %610 = vmatpush2.bf16.msra.mxu0 0
    %611 = vmatprep.subr.bf16.mxu0 0
    %612 = vmatpush2.bf16.msra.mxu0 0
    %613 = vmatprep.subr.bf16.mxu0 0
    %614 = vmatpush2.bf16.msra.mxu0 0
    %615 = vmatprep.subr.bf16.mxu0 0
    %616 = vmatpush2.bf16.msra.mxu0 0
    %617 = vmatprep.subr.bf16.mxu0 0
    %618 = vmatpush2.bf16.msra.mxu0 0
    %619 = vmatprep.mubr.bf16.mxu0 0
    %620 = vmatmul.mubr.bf16.gmra.mxu0 %v415
    %v621 = vpop.f32.mrf.mxu0
    %v622 = vadd.f32 %v533, %v621
    %v623 = vpop.f32.mrf.mxu0
    %v624 = vpop.f32.mrf.mxu0
    %v625 = vadd.f32 %v536, %v624
    %v626 = vpop.f32.mrf.mxu0
    %627 = vdwg.mxu0
    %s628 = scalar_lea.vmem %s4, 1
    %v629 = vld [vmem:[%s628] sm:$0x1]
    %v631 = vlaneseq
    %v632 = vshrl.u32 %v631, 7
    %v633 = vsub.s32 0, %v632
    %v634 = vrot.slane %v629, %v633
    %v636 = vadd.f32 %v622, %v634
    %v637 = vadd.f32 %v625, %v634
    %v638 = vmax.f32 %v636, 0.0
    %v639 = vmax.f32 %v637, 0.0
    %v640 = vpack.c.bf16 %v639, %v638
    %641 = vmatprep.subr.bf16.mxu0 0
    %642 = vmatpush1.bf16.msra.mxu0 0
    %643 = vmatprep.subr.bf16.mxu0 0
    %644 = vmatpush1.bf16.msra.mxu0 0
    %645 = vmatprep.subr.bf16.mxu0 0
    %646 = vmatpush1.bf16.msra.mxu0 0
    %647 = vmatprep.subr.bf16.mxu0 0
    %648 = vmatpush1.bf16.msra.mxu0 0
    %649 = vmatprep.subr.bf16.mxu0 0
    %650 = vmatpush1.bf16.msra.mxu0 0
    %651 = vmatprep.subr.bf16.mxu0 0
    %652 = vmatpush1.bf16.msra.mxu0 0
    %653 = vmatprep.subr.bf16.mxu0 0
    %654 = vmatpush1.bf16.msra.mxu0 0
    %655 = vmatprep.subr.bf16.mxu0 0
    %656 = vmatpush1.bf16.msra.mxu0 %v640
    %657 = vmatprep.subr.bf16.mxu0 0
    %658 = vmatpush2.bf16.msra.mxu0 0
    %659 = vmatprep.subr.bf16.mxu0 0
    %660 = vmatpush2.bf16.msra.mxu0 0
    %661 = vmatprep.subr.bf16.mxu0 0
    %662 = vmatpush2.bf16.msra.mxu0 0
    %663 = vmatprep.subr.bf16.mxu0 0
    %664 = vmatpush2.bf16.msra.mxu0 0
    %665 = vmatprep.subr.bf16.mxu0 0
    %666 = vmatpush2.bf16.msra.mxu0 0
    %667 = vmatprep.subr.bf16.mxu0 0
    %668 = vmatpush2.bf16.msra.mxu0 0
    %669 = vmatprep.subr.bf16.mxu0 0
    %670 = vmatpush2.bf16.msra.mxu0 0
    %671 = vmatprep.subr.bf16.mxu0 0
    %672 = vmatpush2.bf16.msra.mxu0 0
    %673 = vmatprep.mubr.bf16.mxu0 0
    %674 = vmatmul.mubr.bf16.gmra.mxu0 %v108
    %v675 = vpop.f32.mrf.mxu0
    %v676 = vadd.f32 0.0, %v675
    %v677 = vpop.f32.mrf.mxu0
    %v678 = vpop.f32.mrf.mxu0
    %v679 = vadd.f32 0.0, %v678
    %v680 = vpop.f32.mrf.mxu0
    %681 = vdwg.mxu0
    %v682 = vpack.c.bf16 %v679, %v676
    %s683 = scalar_lea.vmem [#allocation7], 128
    %v684 = vld [vmem:[%s683] sm:$0xf]
    %v685 = vld [vmem:[%s683 + $0x4] sm:$0xf]
    %v686 = vld [vmem:[%s683 + $0x8] sm:$0xf]
    %v687 = vld [vmem:[%s683 + $0xc] sm:$0xf]
    %v688 = vld [vmem:[%s683 + $0x10] sm:$0xf]
    %v689 = vld [vmem:[%s683 + $0x14] sm:$0xf]
    %v690 = vld [vmem:[%s683 + $0x18] sm:$0xf]
    %v691 = vld [vmem:[%s683 + $0x1c] sm:$0xf]
    %v692 = vld [vmem:[%s683 + $0x20] sm:$0xf]
    %v693 = vld [vmem:[%s683 + $0x24] sm:$0xf]
    %v694 = vld [vmem:[%s683 + $0x28] sm:$0xf]
    %v695 = vld [vmem:[%s683 + $0x2c] sm:$0xf]
    %v696 = vld [vmem:[%s683 + $0x30] sm:$0xf]
    %v697 = vld [vmem:[%s683 + $0x34] sm:$0xf]
    %v698 = vld [vmem:[%s683 + $0x38] sm:$0xf]
    %v699 = vld [vmem:[%s683 + $0x3c] sm:$0xf]
    %s700 = scalar_lea.vmem [#allocation8], 128
    %v701 = vld [vmem:[%s700] sm:$0xf]
    %v702 = vld [vmem:[%s700 + $0x4] sm:$0xf]
    %v703 = vld [vmem:[%s700 + $0x8] sm:$0xf]
    %v704 = vld [vmem:[%s700 + $0xc] sm:$0xf]
    %v705 = vld [vmem:[%s700 + $0x10] sm:$0xf]
    %v706 = vld [vmem:[%s700 + $0x14] sm:$0xf]
    %v707 = vld [vmem:[%s700 + $0x18] sm:$0xf]
    %v708 = vld [vmem:[%s700 + $0x1c] sm:$0xf]
    %v709 = vld [vmem:[%s700 + $0x20] sm:$0xf]
    %v710 = vld [vmem:[%s700 + $0x24] sm:$0xf]
    %v711 = vld [vmem:[%s700 + $0x28] sm:$0xf]
    %v712 = vld [vmem:[%s700 + $0x2c] sm:$0xf]
    %v713 = vld [vmem:[%s700 + $0x30] sm:$0xf]
    %v714 = vld [vmem:[%s700 + $0x34] sm:$0xf]
    %v715 = vld [vmem:[%s700 + $0x38] sm:$0xf]
    %v716 = vld [vmem:[%s700 + $0x3c] sm:$0xf]
    %v733 = vunpack.c.l.b16 %v701
    %v734 = vunpack.c.l.b16 %v702
    %v735 = vunpack.c.l.b16 %v703
    %v736 = vunpack.c.l.b16 %v704
    %v737 = vunpack.c.l.b16 %v705
    %v738 = vunpack.c.l.b16 %v706
    %v739 = vunpack.c.l.b16 %v707
    %v740 = vunpack.c.l.b16 %v708
    %v741 = vunpack.c.l.b16 %v709
    %v742 = vunpack.c.l.b16 %v710
    %v743 = vunpack.c.l.b16 %v711
    %v744 = vunpack.c.l.b16 %v712
    %v745 = vunpack.c.l.b16 %v713
    %v746 = vunpack.c.l.b16 %v714
    %v747 = vunpack.c.l.b16 %v715
    %v748 = vunpack.c.l.b16 %v716
    %v749 = vpack.c.b16 %v734, %v733
    %v750 = vpack.c.b16 %v736, %v735
    %v751 = vpack.c.b16 %v738, %v737
    %v752 = vpack.c.b16 %v740, %v739
    %v753 = vpack.c.b16 %v742, %v741
    %v754 = vpack.c.b16 %v744, %v743
    %v755 = vpack.c.b16 %v746, %v745
    %v756 = vpack.c.b16 %v748, %v747
    %765 = vmatprep.subr.bf16.mxu0 0
    %766 = vmatpush1.bf16.msra.mxu0 %v756
    %767 = vmatprep.subr.bf16.mxu0 0
    %768 = vmatpush1.bf16.msra.mxu0 %v755
    %769 = vmatprep.subr.bf16.mxu0 0
    %770 = vmatpush1.bf16.msra.mxu0 %v754
    %771 = vmatprep.subr.bf16.mxu0 0
    %772 = vmatpush1.bf16.msra.mxu0 %v753
    %773 = vmatprep.subr.bf16.mxu0 0
    %774 = vmatpush1.bf16.msra.mxu0 %v752
    %775 = vmatprep.subr.bf16.mxu0 0
    %776 = vmatpush1.bf16.msra.mxu0 %v751
    %777 = vmatprep.subr.bf16.mxu0 0
    %778 = vmatpush1.bf16.msra.mxu0 %v750
    %779 = vmatprep.subr.bf16.mxu0 0
    %780 = vmatpush1.bf16.msra.mxu0 %v749
    %781 = vmatprep.subr.bf16.mxu0 0
    %782 = vmatpush2.bf16.msra.mxu0 0
    %783 = vmatprep.subr.bf16.mxu0 0
    %784 = vmatpush2.bf16.msra.mxu0 0
    %785 = vmatprep.subr.bf16.mxu0 0
    %786 = vmatpush2.bf16.msra.mxu0 0
    %787 = vmatprep.subr.bf16.mxu0 0
    %788 = vmatpush2.bf16.msra.mxu0 0
    %789 = vmatprep.subr.bf16.mxu0 0
    %790 = vmatpush2.bf16.msra.mxu0 0
    %791 = vmatprep.subr.bf16.mxu0 0
    %792 = vmatpush2.bf16.msra.mxu0 0
    %793 = vmatprep.subr.bf16.mxu0 0
    %794 = vmatpush2.bf16.msra.mxu0 0
    %795 = vmatprep.subr.bf16.mxu0 0
    %796 = vmatpush2.bf16.msra.mxu0 0
    %797 = vmatprep.mubr.bf16.mxu0 0
    %798 = vmatmul.mubr.bf16.gmra.mxu0 %v640
    %v799 = vpop.f32.mrf.mxu0
    %v800 = vadd.f32 0.0, %v799
    %v801 = vpop.f32.mrf.mxu0
    %v802 = vpop.f32.mrf.mxu0
    %v803 = vadd.f32 0.0, %v802
    %v804 = vpop.f32.mrf.mxu0
    %805 = vdwg.mxu0
    %v822 = vunpack.c.l.b16 %v684
    %v823 = vunpack.c.l.b16 %v685
    %v824 = vunpack.c.l.b16 %v686
    %v825 = vunpack.c.l.b16 %v687
    %v826 = vunpack.c.l.b16 %v688
    %v827 = vunpack.c.l.b16 %v689
    %v828 = vunpack.c.l.b16 %v690
    %v829 = vunpack.c.l.b16 %v691
    %v830 = vunpack.c.l.b16 %v692
    %v831 = vunpack.c.l.b16 %v693
    %v832 = vunpack.c.l.b16 %v694
    %v833 = vunpack.c.l.b16 %v695
    %v834 = vunpack.c.l.b16 %v696
    %v835 = vunpack.c.l.b16 %v697
    %v836 = vunpack.c.l.b16 %v698
    %v837 = vunpack.c.l.b16 %v699
    %v838 = vpack.c.b16 %v823, %v822
    %v839 = vpack.c.b16 %v825, %v824
    %v840 = vpack.c.b16 %v827, %v826
    %v841 = vpack.c.b16 %v829, %v828
    %v842 = vpack.c.b16 %v831, %v830
    %v843 = vpack.c.b16 %v833, %v832
    %v844 = vpack.c.b16 %v835, %v834
    %v845 = vpack.c.b16 %v837, %v836
    %854 = vmatprep.subr.bf16.mxu0 0
    %855 = vmatpush1.bf16.msra.mxu0 %v845
    %856 = vmatprep.subr.bf16.mxu0 0
    %857 = vmatpush1.bf16.msra.mxu0 %v844
    %858 = vmatprep.subr.bf16.mxu0 0
    %859 = vmatpush1.bf16.msra.mxu0 %v843
    %860 = vmatprep.subr.bf16.mxu0 0
    %861 = vmatpush1.bf16.msra.mxu0 %v842
    %862 = vmatprep.subr.bf16.mxu0 0
    %863 = vmatpush1.bf16.msra.mxu0 %v841
    %864 = vmatprep.subr.bf16.mxu0 0
    %865 = vmatpush1.bf16.msra.mxu0 %v840
    %866 = vmatprep.subr.bf16.mxu0 0
    %867 = vmatpush1.bf16.msra.mxu0 %v839
    %868 = vmatprep.subr.bf16.mxu0 0
    %869 = vmatpush1.bf16.msra.mxu0 %v838
    %870 = vmatprep.subr.bf16.mxu0 0
    %871 = vmatpush2.bf16.msra.mxu0 0
    %872 = vmatprep.subr.bf16.mxu0 0
    %873 = vmatpush2.bf16.msra.mxu0 0
    %874 = vmatprep.subr.bf16.mxu0 0
    %875 = vmatpush2.bf16.msra.mxu0 0
    %876 = vmatprep.subr.bf16.mxu0 0
    %877 = vmatpush2.bf16.msra.mxu0 0
    %878 = vmatprep.subr.bf16.mxu0 0
    %879 = vmatpush2.bf16.msra.mxu0 0
    %880 = vmatprep.subr.bf16.mxu0 0
    %881 = vmatpush2.bf16.msra.mxu0 0
    %882 = vmatprep.subr.bf16.mxu0 0
    %883 = vmatpush2.bf16.msra.mxu0 0
    %884 = vmatprep.subr.bf16.mxu0 0
    %885 = vmatpush2.bf16.msra.mxu0 0
    %886 = vmatprep.mubr.bf16.mxu0 0
    %887 = vmatmul.mubr.bf16.gmra.mxu0 %v682
    %v888 = vpop.f32.mrf.mxu0
    %v889 = vadd.f32 %v800, %v888
    %v890 = vpop.f32.mrf.mxu0
    %v891 = vpop.f32.mrf.mxu0
    %v892 = vadd.f32 %v803, %v891
    %v893 = vpop.f32.mrf.mxu0
    %894 = vdwg.mxu0
    %s895 = scalar_lea.vmem %s4, 2
    %v896 = vld [vmem:[%s895] sm:$0x1]
    %v898 = vlaneseq
    %v899 = vshrl.u32 %v898, 7
    %v900 = vsub.s32 0, %v899
    %v901 = vrot.slane %v896, %v900
    %v903 = vadd.f32 %v889, %v901
    %v904 = vadd.f32 %v892, %v901
    %v905 = vmax.f32 %v903, 0.0
    %v906 = vmax.f32 %v904, 0.0
    %v907 = vpack.c.bf16 %v906, %v905
    %908 = vmatprep.subr.bf16.mxu0 0
    %909 = vmatpush1.bf16.msra.mxu0 0
    %910 = vmatprep.subr.bf16.mxu0 0
    %911 = vmatpush1.bf16.msra.mxu0 0
    %912 = vmatprep.subr.bf16.mxu0 0
    %913 = vmatpush1.bf16.msra.mxu0 0
    %914 = vmatprep.subr.bf16.mxu0 0
    %915 = vmatpush1.bf16.msra.mxu0 0
    %916 = vmatprep.subr.bf16.mxu0 0
    %917 = vmatpush1.bf16.msra.mxu0 0
    %918 = vmatprep.subr.bf16.mxu0 0
    %919 = vmatpush1.bf16.msra.mxu0 0
    %920 = vmatprep.subr.bf16.mxu0 0
    %921 = vmatpush1.bf16.msra.mxu0 0
    %922 = vmatprep.subr.bf16.mxu0 0
    %923 = vmatpush1.bf16.msra.mxu0 %v907
    %924 = vmatprep.subr.bf16.mxu0 0
    %925 = vmatpush2.bf16.msra.mxu0 0
    %926 = vmatprep.subr.bf16.mxu0 0
    %927 = vmatpush2.bf16.msra.mxu0 0
    %928 = vmatprep.subr.bf16.mxu0 0
    %929 = vmatpush2.bf16.msra.mxu0 0
    %930 = vmatprep.subr.bf16.mxu0 0
    %931 = vmatpush2.bf16.msra.mxu0 0
    %932 = vmatprep.subr.bf16.mxu0 0
    %933 = vmatpush2.bf16.msra.mxu0 0
    %934 = vmatprep.subr.bf16.mxu0 0
    %935 = vmatpush2.bf16.msra.mxu0 0
    %936 = vmatprep.subr.bf16.mxu0 0
    %937 = vmatpush2.bf16.msra.mxu0 0
    %938 = vmatprep.subr.bf16.mxu0 0
    %939 = vmatpush2.bf16.msra.mxu0 0
    %940 = vmatprep.mubr.bf16.mxu0 0
    %941 = vmatmul.mubr.bf16.gmra.mxu0 %v108
    %v942 = vpop.f32.mrf.mxu0
    %v943 = vadd.f32 0.0, %v942
    %v944 = vpop.f32.mrf.mxu0
    %v945 = vpop.f32.mrf.mxu0
    %v946 = vadd.f32 0.0, %v945
    %v947 = vpop.f32.mrf.mxu0
    %948 = vdwg.mxu0
    %v949 = vpack.c.bf16 %v946, %v943
    %s950 = scalar_lea.vmem [#allocation7], 192
    %v951 = vld [vmem:[%s950] sm:$0xf]
    %v952 = vld [vmem:[%s950 + $0x4] sm:$0xf]
    %v953 = vld [vmem:[%s950 + $0x8] sm:$0xf]
    %v954 = vld [vmem:[%s950 + $0xc] sm:$0xf]
    %v955 = vld [vmem:[%s950 + $0x10] sm:$0xf]
    %v956 = vld [vmem:[%s950 + $0x14] sm:$0xf]
    %v957 = vld [vmem:[%s950 + $0x18] sm:$0xf]
    %v958 = vld [vmem:[%s950 + $0x1c] sm:$0xf]
    %v959 = vld [vmem:[%s950 + $0x20] sm:$0xf]
    %v960 = vld [vmem:[%s950 + $0x24] sm:$0xf]
    %v961 = vld [vmem:[%s950 + $0x28] sm:$0xf]
    %v962 = vld [vmem:[%s950 + $0x2c] sm:$0xf]
    %v963 = vld [vmem:[%s950 + $0x30] sm:$0xf]
    %v964 = vld [vmem:[%s950 + $0x34] sm:$0xf]
    %v965 = vld [vmem:[%s950 + $0x38] sm:$0xf]
    %v966 = vld [vmem:[%s950 + $0x3c] sm:$0xf]
    %s967 = scalar_lea.vmem [#allocation8], 192
    %v968 = vld [vmem:[%s967] sm:$0xf]
    %v969 = vld [vmem:[%s967 + $0x4] sm:$0xf]
    %v970 = vld [vmem:[%s967 + $0x8] sm:$0xf]
    %v971 = vld [vmem:[%s967 + $0xc] sm:$0xf]
    %v972 = vld [vmem:[%s967 + $0x10] sm:$0xf]
    %v973 = vld [vmem:[%s967 + $0x14] sm:$0xf]
    %v974 = vld [vmem:[%s967 + $0x18] sm:$0xf]
    %v975 = vld [vmem:[%s967 + $0x1c] sm:$0xf]
    %v976 = vld [vmem:[%s967 + $0x20] sm:$0xf]
    %v977 = vld [vmem:[%s967 + $0x24] sm:$0xf]
    %v978 = vld [vmem:[%s967 + $0x28] sm:$0xf]
    %v979 = vld [vmem:[%s967 + $0x2c] sm:$0xf]
    %v980 = vld [vmem:[%s967 + $0x30] sm:$0xf]
    %v981 = vld [vmem:[%s967 + $0x34] sm:$0xf]
    %v982 = vld [vmem:[%s967 + $0x38] sm:$0xf]
    %v983 = vld [vmem:[%s967 + $0x3c] sm:$0xf]
    %v1000 = vunpack.c.l.b16 %v968
    %v1001 = vunpack.c.l.b16 %v969
    %v1002 = vunpack.c.l.b16 %v970
    %v1003 = vunpack.c.l.b16 %v971
    %v1004 = vunpack.c.l.b16 %v972
    %v1005 = vunpack.c.l.b16 %v973
    %v1006 = vunpack.c.l.b16 %v974
    %v1007 = vunpack.c.l.b16 %v975
    %v1008 = vunpack.c.l.b16 %v976
    %v1009 = vunpack.c.l.b16 %v977
    %v1010 = vunpack.c.l.b16 %v978
    %v1011 = vunpack.c.l.b16 %v979
    %v1012 = vunpack.c.l.b16 %v980
    %v1013 = vunpack.c.l.b16 %v981
    %v1014 = vunpack.c.l.b16 %v982
    %v1015 = vunpack.c.l.b16 %v983
    %v1016 = vpack.c.b16 %v1001, %v1000
    %v1017 = vpack.c.b16 %v1003, %v1002
    %v1018 = vpack.c.b16 %v1005, %v1004
    %v1019 = vpack.c.b16 %v1007, %v1006
    %v1020 = vpack.c.b16 %v1009, %v1008
    %v1021 = vpack.c.b16 %v1011, %v1010
    %v1022 = vpack.c.b16 %v1013, %v1012
    %v1023 = vpack.c.b16 %v1015, %v1014
    %1032 = vmatprep.subr.bf16.mxu0 0
    %1033 = vmatpush1.bf16.msra.mxu0 %v1023
    %1034 = vmatprep.subr.bf16.mxu0 0
    %1035 = vmatpush1.bf16.msra.mxu0 %v1022
    %1036 = vmatprep.subr.bf16.mxu0 0
    %1037 = vmatpush1.bf16.msra.mxu0 %v1021
    %1038 = vmatprep.subr.bf16.mxu0 0
    %1039 = vmatpush1.bf16.msra.mxu0 %v1020
    %1040 = vmatprep.subr.bf16.mxu0 0
    %1041 = vmatpush1.bf16.msra.mxu0 %v1019
    %1042 = vmatprep.subr.bf16.mxu0 0
    %1043 = vmatpush1.bf16.msra.mxu0 %v1018
    %1044 = vmatprep.subr.bf16.mxu0 0
    %1045 = vmatpush1.bf16.msra.mxu0 %v1017
    %1046 = vmatprep.subr.bf16.mxu0 0
    %1047 = vmatpush1.bf16.msra.mxu0 %v1016
    %1048 = vmatprep.subr.bf16.mxu0 0
    %1049 = vmatpush2.bf16.msra.mxu0 0
    %1050 = vmatprep.subr.bf16.mxu0 0
    %1051 = vmatpush2.bf16.msra.mxu0 0
    %1052 = vmatprep.subr.bf16.mxu0 0
    %1053 = vmatpush2.bf16.msra.mxu0 0
    %1054 = vmatprep.subr.bf16.mxu0 0
    %1055 = vmatpush2.bf16.msra.mxu0 0
    %1056 = vmatprep.subr.bf16.mxu0 0
    %1057 = vmatpush2.bf16.msra.mxu0 0
    %1058 = vmatprep.subr.bf16.mxu0 0
    %1059 = vmatpush2.bf16.msra.mxu0 0
    %1060 = vmatprep.subr.bf16.mxu0 0
    %1061 = vmatpush2.bf16.msra.mxu0 0
    %1062 = vmatprep.subr.bf16.mxu0 0
    %1063 = vmatpush2.bf16.msra.mxu0 0
    %1064 = vmatprep.mubr.bf16.mxu0 0
    %1065 = vmatmul.mubr.bf16.gmra.mxu0 %v907
    %v1066 = vpop.f32.mrf.mxu0
    %v1067 = vadd.f32 0.0, %v1066
    %v1068 = vpop.f32.mrf.mxu0
    %v1069 = vpop.f32.mrf.mxu0
    %v1070 = vadd.f32 0.0, %v1069
    %v1071 = vpop.f32.mrf.mxu0
    %1072 = vdwg.mxu0
    %v1089 = vunpack.c.l.b16 %v951
    %v1090 = vunpack.c.l.b16 %v952
    %v1091 = vunpack.c.l.b16 %v953
    %v1092 = vunpack.c.l.b16 %v954
    %v1093 = vunpack.c.l.b16 %v955
    %v1094 = vunpack.c.l.b16 %v956
    %v1095 = vunpack.c.l.b16 %v957
    %v1096 = vunpack.c.l.b16 %v958
    %v1097 = vunpack.c.l.b16 %v959
    %v1098 = vunpack.c.l.b16 %v960
    %v1099 = vunpack.c.l.b16 %v961
    %v1100 = vunpack.c.l.b16 %v962
    %v1101 = vunpack.c.l.b16 %v963
    %v1102 = vunpack.c.l.b16 %v964
    %v1103 = vunpack.c.l.b16 %v965
    %v1104 = vunpack.c.l.b16 %v966
    %v1105 = vpack.c.b16 %v1090, %v1089
    %v1106 = vpack.c.b16 %v1092, %v1091
    %v1107 = vpack.c.b16 %v1094, %v1093
    %v1108 = vpack.c.b16 %v1096, %v1095
    %v1109 = vpack.c.b16 %v1098, %v1097
    %v1110 = vpack.c.b16 %v1100, %v1099
    %v1111 = vpack.c.b16 %v1102, %v1101
    %v1112 = vpack.c.b16 %v1104, %v1103
    %1121 = vmatprep.subr.bf16.mxu0 0
    %1122 = vmatpush1.bf16.msra.mxu0 %v1112
    %1123 = vmatprep.subr.bf16.mxu0 0
    %1124 = vmatpush1.bf16.msra.mxu0 %v1111
    %1125 = vmatprep.subr.bf16.mxu0 0
    %1126 = vmatpush1.bf16.msra.mxu0 %v1110
    %1127 = vmatprep.subr.bf16.mxu0 0
    %1128 = vmatpush1.bf16.msra.mxu0 %v1109
    %1129 = vmatprep.subr.bf16.mxu0 0
    %1130 = vmatpush1.bf16.msra.mxu0 %v1108
    %1131 = vmatprep.subr.bf16.mxu0 0
    %1132 = vmatpush1.bf16.msra.mxu0 %v1107
    %1133 = vmatprep.subr.bf16.mxu0 0
    %1134 = vmatpush1.bf16.msra.mxu0 %v1106
    %1135 = vmatprep.subr.bf16.mxu0 0
    %1136 = vmatpush1.bf16.msra.mxu0 %v1105
    %1137 = vmatprep.subr.bf16.mxu0 0
    %1138 = vmatpush2.bf16.msra.mxu0 0
    %1139 = vmatprep.subr.bf16.mxu0 0
    %1140 = vmatpush2.bf16.msra.mxu0 0
    %1141 = vmatprep.subr.bf16.mxu0 0
    %1142 = vmatpush2.bf16.msra.mxu0 0
    %1143 = vmatprep.subr.bf16.mxu0 0
    %1144 = vmatpush2.bf16.msra.mxu0 0
    %1145 = vmatprep.subr.bf16.mxu0 0
    %1146 = vmatpush2.bf16.msra.mxu0 0
    %1147 = vmatprep.subr.bf16.mxu0 0
    %1148 = vmatpush2.bf16.msra.mxu0 0
    %1149 = vmatprep.subr.bf16.mxu0 0
    %1150 = vmatpush2.bf16.msra.mxu0 0
    %1151 = vmatprep.subr.bf16.mxu0 0
    %1152 = vmatpush2.bf16.msra.mxu0 0
    %1153 = vmatprep.mubr.bf16.mxu0 0
    %1154 = vmatmul.mubr.bf16.gmra.mxu0 %v949
    %v1155 = vpop.f32.mrf.mxu0
    %v1156 = vadd.f32 %v1067, %v1155
    %v1157 = vpop.f32.mrf.mxu0
    %v1158 = vpop.f32.mrf.mxu0
    %v1159 = vadd.f32 %v1070, %v1158
    %v1160 = vpop.f32.mrf.mxu0
    %1161 = vdwg.mxu0
    %s1162 = scalar_lea.vmem %s4, 3
    %v1163 = vld [vmem:[%s1162] sm:$0x1]
    %v1165 = vlaneseq
    %v1166 = vshrl.u32 %v1165, 7
    %v1167 = vsub.s32 0, %v1166
    %v1168 = vrot.slane %v1163, %v1167
    %v1170 = vadd.f32 %v1156, %v1168
    %v1171 = vadd.f32 %v1159, %v1168
    %v1172 = vmax.f32 %v1170, 0.0
    %v1173 = vmax.f32 %v1171, 0.0
    %v1174 = vpack.c.bf16 %v1173, %v1172
    %1175 = vmatprep.subr.bf16.mxu0 0
    %1176 = vmatpush1.bf16.msra.mxu0 0
    %1177 = vmatprep.subr.bf16.mxu0 0
    %1178 = vmatpush1.bf16.msra.mxu0 0
    %1179 = vmatprep.subr.bf16.mxu0 0
    %1180 = vmatpush1.bf16.msra.mxu0 0
    %1181 = vmatprep.subr.bf16.mxu0 0
    %1182 = vmatpush1.bf16.msra.mxu0 0
    %1183 = vmatprep.subr.bf16.mxu0 0
    %1184 = vmatpush1.bf16.msra.mxu0 0
    %1185 = vmatprep.subr.bf16.mxu0 0
    %1186 = vmatpush1.bf16.msra.mxu0 0
    %1187 = vmatprep.subr.bf16.mxu0 0
    %1188 = vmatpush1.bf16.msra.mxu0 0
    %1189 = vmatprep.subr.bf16.mxu0 0
    %1190 = vmatpush1.bf16.msra.mxu0 %v1174
    %1191 = vmatprep.subr.bf16.mxu0 0
    %1192 = vmatpush2.bf16.msra.mxu0 0
    %1193 = vmatprep.subr.bf16.mxu0 0
    %1194 = vmatpush2.bf16.msra.mxu0 0
    %1195 = vmatprep.subr.bf16.mxu0 0
    %1196 = vmatpush2.bf16.msra.mxu0 0
    %1197 = vmatprep.subr.bf16.mxu0 0
    %1198 = vmatpush2.bf16.msra.mxu0 0
    %1199 = vmatprep.subr.bf16.mxu0 0
    %1200 = vmatpush2.bf16.msra.mxu0 0
    %1201 = vmatprep.subr.bf16.mxu0 0
    %1202 = vmatpush2.bf16.msra.mxu0 0
    %1203 = vmatprep.subr.bf16.mxu0 0
    %1204 = vmatpush2.bf16.msra.mxu0 0
    %1205 = vmatprep.subr.bf16.mxu0 0
    %1206 = vmatpush2.bf16.msra.mxu0 0
    %1207 = vmatprep.mubr.bf16.mxu0 0
    %1208 = vmatmul.mubr.bf16.gmra.mxu0 %v108
    %v1209 = vpop.f32.mrf.mxu0
    %v1210 = vadd.f32 0.0, %v1209
    %v1211 = vpop.f32.mrf.mxu0
    %v1212 = vpop.f32.mrf.mxu0
    %v1213 = vadd.f32 0.0, %v1212
    %v1214 = vpop.f32.mrf.mxu0
    %1215 = vdwg.mxu0
    %v1216 = vpack.c.bf16 %v1213, %v1210
    %s1217 = scalar_lea.vmem [#allocation7], 256
    %v1218 = vld [vmem:[%s1217] sm:$0xf]
    %v1219 = vld [vmem:[%s1217 + $0x4] sm:$0xf]
    %v1220 = vld [vmem:[%s1217 + $0x8] sm:$0xf]
    %v1221 = vld [vmem:[%s1217 + $0xc] sm:$0xf]
    %v1222 = vld [vmem:[%s1217 + $0x10] sm:$0xf]
    %v1223 = vld [vmem:[%s1217 + $0x14] sm:$0xf]
    %v1224 = vld [vmem:[%s1217 + $0x18] sm:$0xf]
    %v1225 = vld [vmem:[%s1217 + $0x1c] sm:$0xf]
    %v1226 = vld [vmem:[%s1217 + $0x20] sm:$0xf]
    %v1227 = vld [vmem:[%s1217 + $0x24] sm:$0xf]
    %v1228 = vld [vmem:[%s1217 + $0x28] sm:$0xf]
    %v1229 = vld [vmem:[%s1217 + $0x2c] sm:$0xf]
    %v1230 = vld [vmem:[%s1217 + $0x30] sm:$0xf]
    %v1231 = vld [vmem:[%s1217 + $0x34] sm:$0xf]
    %v1232 = vld [vmem:[%s1217 + $0x38] sm:$0xf]
    %v1233 = vld [vmem:[%s1217 + $0x3c] sm:$0xf]
    %s1234 = scalar_lea.vmem [#allocation8], 256
    %v1235 = vld [vmem:[%s1234] sm:$0xf]
    %v1236 = vld [vmem:[%s1234 + $0x4] sm:$0xf]
    %v1237 = vld [vmem:[%s1234 + $0x8] sm:$0xf]
    %v1238 = vld [vmem:[%s1234 + $0xc] sm:$0xf]
    %v1239 = vld [vmem:[%s1234 + $0x10] sm:$0xf]
    %v1240 = vld [vmem:[%s1234 + $0x14] sm:$0xf]
    %v1241 = vld [vmem:[%s1234 + $0x18] sm:$0xf]
    %v1242 = vld [vmem:[%s1234 + $0x1c] sm:$0xf]
    %v1243 = vld [vmem:[%s1234 + $0x20] sm:$0xf]
    %v1244 = vld [vmem:[%s1234 + $0x24] sm:$0xf]
    %v1245 = vld [vmem:[%s1234 + $0x28] sm:$0xf]
    %v1246 = vld [vmem:[%s1234 + $0x2c] sm:$0xf]
    %v1247 = vld [vmem:[%s1234 + $0x30] sm:$0xf]
    %v1248 = vld [vmem:[%s1234 + $0x34] sm:$0xf]
    %v1249 = vld [vmem:[%s1234 + $0x38] sm:$0xf]
    %v1250 = vld [vmem:[%s1234 + $0x3c] sm:$0xf]
    %v1267 = vunpack.c.l.b16 %v1235
    %v1268 = vunpack.c.l.b16 %v1236
    %v1269 = vunpack.c.l.b16 %v1237
    %v1270 = vunpack.c.l.b16 %v1238
    %v1271 = vunpack.c.l.b16 %v1239
    %v1272 = vunpack.c.l.b16 %v1240
    %v1273 = vunpack.c.l.b16 %v1241
    %v1274 = vunpack.c.l.b16 %v1242
    %v1275 = vunpack.c.l.b16 %v1243
    %v1276 = vunpack.c.l.b16 %v1244
    %v1277 = vunpack.c.l.b16 %v1245
    %v1278 = vunpack.c.l.b16 %v1246
    %v1279 = vunpack.c.l.b16 %v1247
    %v1280 = vunpack.c.l.b16 %v1248
    %v1281 = vunpack.c.l.b16 %v1249
    %v1282 = vunpack.c.l.b16 %v1250
    %v1283 = vpack.c.b16 %v1268, %v1267
    %v1284 = vpack.c.b16 %v1270, %v1269
    %v1285 = vpack.c.b16 %v1272, %v1271
    %v1286 = vpack.c.b16 %v1274, %v1273
    %v1287 = vpack.c.b16 %v1276, %v1275
    %v1288 = vpack.c.b16 %v1278, %v1277
    %v1289 = vpack.c.b16 %v1280, %v1279
    %v1290 = vpack.c.b16 %v1282, %v1281
    %1299 = vmatprep.subr.bf16.mxu0 0
    %1300 = vmatpush1.bf16.msra.mxu0 %v1290
    %1301 = vmatprep.subr.bf16.mxu0 0
    %1302 = vmatpush1.bf16.msra.mxu0 %v1289
    %1303 = vmatprep.subr.bf16.mxu0 0
    %1304 = vmatpush1.bf16.msra.mxu0 %v1288
    %1305 = vmatprep.subr.bf16.mxu0 0
    %1306 = vmatpush1.bf16.msra.mxu0 %v1287
    %1307 = vmatprep.subr.bf16.mxu0 0
    %1308 = vmatpush1.bf16.msra.mxu0 %v1286
    %1309 = vmatprep.subr.bf16.mxu0 0
    %1310 = vmatpush1.bf16.msra.mxu0 %v1285
    %1311 = vmatprep.subr.bf16.mxu0 0
    %1312 = vmatpush1.bf16.msra.mxu0 %v1284
    %1313 = vmatprep.subr.bf16.mxu0 0
    %1314 = vmatpush1.bf16.msra.mxu0 %v1283
    %1315 = vmatprep.subr.bf16.mxu0 0
    %1316 = vmatpush2.bf16.msra.mxu0 0
    %1317 = vmatprep.subr.bf16.mxu0 0
    %1318 = vmatpush2.bf16.msra.mxu0 0
    %1319 = vmatprep.subr.bf16.mxu0 0
    %1320 = vmatpush2.bf16.msra.mxu0 0
    %1321 = vmatprep.subr.bf16.mxu0 0
    %1322 = vmatpush2.bf16.msra.mxu0 0
    %1323 = vmatprep.subr.bf16.mxu0 0
    %1324 = vmatpush2.bf16.msra.mxu0 0
    %1325 = vmatprep.subr.bf16.mxu0 0
    %1326 = vmatpush2.bf16.msra.mxu0 0
    %1327 = vmatprep.subr.bf16.mxu0 0
    %1328 = vmatpush2.bf16.msra.mxu0 0
    %1329 = vmatprep.subr.bf16.mxu0 0
    %1330 = vmatpush2.bf16.msra.mxu0 0
    %1331 = vmatprep.mubr.bf16.mxu0 0
    %1332 = vmatmul.mubr.bf16.gmra.mxu0 %v1174
    %v1333 = vpop.f32.mrf.mxu0
    %v1334 = vadd.f32 0.0, %v1333
    %v1335 = vpop.f32.mrf.mxu0
    %v1336 = vpop.f32.mrf.mxu0
    %v1337 = vadd.f32 0.0, %v1336
    %v1338 = vpop.f32.mrf.mxu0
    %1339 = vdwg.mxu0
    %v1356 = vunpack.c.l.b16 %v1218
    %v1357 = vunpack.c.l.b16 %v1219
    %v1358 = vunpack.c.l.b16 %v1220
    %v1359 = vunpack.c.l.b16 %v1221
    %v1360 = vunpack.c.l.b16 %v1222
    %v1361 = vunpack.c.l.b16 %v1223
    %v1362 = vunpack.c.l.b16 %v1224
    %v1363 = vunpack.c.l.b16 %v1225
    %v1364 = vunpack.c.l.b16 %v1226
    %v1365 = vunpack.c.l.b16 %v1227
    %v1366 = vunpack.c.l.b16 %v1228
    %v1367 = vunpack.c.l.b16 %v1229
    %v1368 = vunpack.c.l.b16 %v1230
    %v1369 = vunpack.c.l.b16 %v1231
    %v1370 = vunpack.c.l.b16 %v1232
    %v1371 = vunpack.c.l.b16 %v1233
    %v1372 = vpack.c.b16 %v1357, %v1356
    %v1373 = vpack.c.b16 %v1359, %v1358
    %v1374 = vpack.c.b16 %v1361, %v1360
    %v1375 = vpack.c.b16 %v1363, %v1362
    %v1376 = vpack.c.b16 %v1365, %v1364
    %v1377 = vpack.c.b16 %v1367, %v1366
    %v1378 = vpack.c.b16 %v1369, %v1368
    %v1379 = vpack.c.b16 %v1371, %v1370
    %1388 = vmatprep.subr.bf16.mxu0 0
    %1389 = vmatpush1.bf16.msra.mxu0 %v1379
    %1390 = vmatprep.subr.bf16.mxu0 0
    %1391 = vmatpush1.bf16.msra.mxu0 %v1378
    %1392 = vmatprep.subr.bf16.mxu0 0
    %1393 = vmatpush1.bf16.msra.mxu0 %v1377
    %1394 = vmatprep.subr.bf16.mxu0 0
    %1395 = vmatpush1.bf16.msra.mxu0 %v1376
    %1396 = vmatprep.subr.bf16.mxu0 0
    %1397 = vmatpush1.bf16.msra.mxu0 %v1375
    %1398 = vmatprep.subr.bf16.mxu0 0
    %1399 = vmatpush1.bf16.msra.mxu0 %v1374
    %1400 = vmatprep.subr.bf16.mxu0 0
    %1401 = vmatpush1.bf16.msra.mxu0 %v1373
    %1402 = vmatprep.subr.bf16.mxu0 0
    %1403 = vmatpush1.bf16.msra.mxu0 %v1372
    %1404 = vmatprep.subr.bf16.mxu0 0
    %1405 = vmatpush2.bf16.msra.mxu0 0
    %1406 = vmatprep.subr.bf16.mxu0 0
    %1407 = vmatpush2.bf16.msra.mxu0 0
    %1408 = vmatprep.subr.bf16.mxu0 0
    %1409 = vmatpush2.bf16.msra.mxu0 0
    %1410 = vmatprep.subr.bf16.mxu0 0
    %1411 = vmatpush2.bf16.msra.mxu0 0
    %1412 = vmatprep.subr.bf16.mxu0 0
    %1413 = vmatpush2.bf16.msra.mxu0 0
    %1414 = vmatprep.subr.bf16.mxu0 0
    %1415 = vmatpush2.bf16.msra.mxu0 0
    %1416 = vmatprep.subr.bf16.mxu0 0
    %1417 = vmatpush2.bf16.msra.mxu0 0
    %1418 = vmatprep.subr.bf16.mxu0 0
    %1419 = vmatpush2.bf16.msra.mxu0 0
    %1420 = vmatprep.mubr.bf16.mxu0 0
    %1421 = vmatmul.mubr.bf16.gmra.mxu0 %v1216
    %v1422 = vpop.f32.mrf.mxu0
    %v1423 = vadd.f32 %v1334, %v1422
    %v1424 = vpop.f32.mrf.mxu0
    %v1425 = vpop.f32.mrf.mxu0
    %v1426 = vadd.f32 %v1337, %v1425
    %v1427 = vpop.f32.mrf.mxu0
    %1428 = vdwg.mxu0
    %s1429 = scalar_lea.vmem %s4, 4
    %v1430 = vld [vmem:[%s1429] sm:$0x1]
    %v1432 = vlaneseq
    %v1433 = vshrl.u32 %v1432, 7
    %v1434 = vsub.s32 0, %v1433
    %v1435 = vrot.slane %v1430, %v1434
    %v1437 = vadd.f32 %v1423, %v1435
    %v1438 = vadd.f32 %v1426, %v1435
    %v1439 = vmax.f32 %v1437, 0.0
    %v1440 = vmax.f32 %v1438, 0.0
    %v1441 = vpack.c.bf16 %v1440, %v1439
    %v1442 = vld [vmem:[#allocation10] sm:$0xf]
    %v1443 = vld [vmem:[#allocation10 + $0x4] sm:$0xf]
    %v1444 = vld [vmem:[#allocation10 + $0x8] sm:$0xf]
    %v1445 = vld [vmem:[#allocation10 + $0xc] sm:$0xf]
    %v1446 = vld [vmem:[#allocation10 + $0x10] sm:$0xf]
    %v1447 = vld [vmem:[#allocation10 + $0x14] sm:$0xf]
    %v1448 = vld [vmem:[#allocation10 + $0x18] sm:$0xf]
    %v1449 = vld [vmem:[#allocation10 + $0x1c] sm:$0xf]
    %v1450 = vld [vmem:[#allocation10 + $0x20] sm:$0xf]
    %v1451 = vld [vmem:[#allocation10 + $0x24] sm:$0xf]
    %v1452 = vld [vmem:[#allocation10 + $0x28] sm:$0xf]
    %v1453 = vld [vmem:[#allocation10 + $0x2c] sm:$0xf]
    %v1454 = vld [vmem:[#allocation10 + $0x30] sm:$0xf]
    %v1455 = vld [vmem:[#allocation10 + $0x34] sm:$0xf]
    %v1456 = vld [vmem:[#allocation10 + $0x38] sm:$0xf]
    %v1457 = vld [vmem:[#allocation10 + $0x3c] sm:$0xf]
    %v1458 = vld [vmem:[%s6] sm:$0x1]
    %v1460 = vlaneseq
    %v1461 = vshrl.u32 %v1460, 7
    %v1462 = vsub.s32 0, %v1461
    %v1463 = vrot.slane %v1458, %v1462
    %v1481 = vunpack.c.l.b16 %v1442
    %v1482 = vunpack.c.l.b16 %v1443
    %v1483 = vunpack.c.l.b16 %v1444
    %v1484 = vunpack.c.l.b16 %v1445
    %v1485 = vunpack.c.l.b16 %v1446
    %v1486 = vunpack.c.l.b16 %v1447
    %v1487 = vunpack.c.l.b16 %v1448
    %v1488 = vunpack.c.l.b16 %v1449
    %v1489 = vunpack.c.l.b16 %v1450
    %v1490 = vunpack.c.l.b16 %v1451
    %v1491 = vunpack.c.l.b16 %v1452
    %v1492 = vunpack.c.l.b16 %v1453
    %v1493 = vunpack.c.l.b16 %v1454
    %v1494 = vunpack.c.l.b16 %v1455
    %v1495 = vunpack.c.l.b16 %v1456
    %v1496 = vunpack.c.l.b16 %v1457
    %v1497 = vpack.c.b16 %v1482, %v1481
    %v1498 = vpack.c.b16 %v1484, %v1483
    %v1499 = vpack.c.b16 %v1486, %v1485
    %v1500 = vpack.c.b16 %v1488, %v1487
    %v1501 = vpack.c.b16 %v1490, %v1489
    %v1502 = vpack.c.b16 %v1492, %v1491
    %v1503 = vpack.c.b16 %v1494, %v1493
    %v1504 = vpack.c.b16 %v1496, %v1495
    %1513 = vmatprep.subr.bf16.mxu0 0
    %1514 = vmatpush1.bf16.msra.mxu0 %v1504
    %1515 = vmatprep.subr.bf16.mxu0 0
    %1516 = vmatpush1.bf16.msra.mxu0 %v1503
    %1517 = vmatprep.subr.bf16.mxu0 0
    %1518 = vmatpush1.bf16.msra.mxu0 %v1502
    %1519 = vmatprep.subr.bf16.mxu0 0
    %1520 = vmatpush1.bf16.msra.mxu0 %v1501
    %1521 = vmatprep.subr.bf16.mxu0 0
    %1522 = vmatpush1.bf16.msra.mxu0 %v1500
    %1523 = vmatprep.subr.bf16.mxu0 0
    %1524 = vmatpush1.bf16.msra.mxu0 %v1499
    %1525 = vmatprep.subr.bf16.mxu0 0
    %1526 = vmatpush1.bf16.msra.mxu0 %v1498
    %1527 = vmatprep.subr.bf16.mxu0 0
    %1528 = vmatpush1.bf16.msra.mxu0 %v1497
    %1529 = vmatprep.subr.bf16.mxu0 0
    %1530 = vmatpush2.bf16.msra.mxu0 0
    %1531 = vmatprep.subr.bf16.mxu0 0
    %1532 = vmatpush2.bf16.msra.mxu0 0
    %1533 = vmatprep.subr.bf16.mxu0 0
    %1534 = vmatpush2.bf16.msra.mxu0 0
    %1535 = vmatprep.subr.bf16.mxu0 0
    %1536 = vmatpush2.bf16.msra.mxu0 0
    %1537 = vmatprep.subr.bf16.mxu0 0
    %1538 = vmatpush2.bf16.msra.mxu0 0
    %1539 = vmatprep.subr.bf16.mxu0 0
    %1540 = vmatpush2.bf16.msra.mxu0 0
    %1541 = vmatprep.subr.bf16.mxu0 0
    %1542 = vmatpush2.bf16.msra.mxu0 0
    %1543 = vmatprep.subr.bf16.mxu0 0
    %1544 = vmatpush2.bf16.msra.mxu0 0
    %1545 = vmatprep.mubr.bf16.mxu0 0
    %1546 = vmatmul.mubr.bf16.gmra.mxu0 %v1441
    %v1547 = vpop.f32.mrf.mxu0
    %v1548 = vadd.f32 %v1463, %v1547
    %v1549 = vpop.f32.mrf.mxu0
    %v1550 = vpop.f32.mrf.mxu0
    %v1551 = vadd.f32 %v1463, %v1550
    %v1552 = vpop.f32.mrf.mxu0
    %1553 = vdwg.mxu0
    %1554 = vst [vmem:[#allocation11] sm:$0xff] %v1548
    %1555 = vst [vmem:[#allocation11 + $0x8] sm:$0xff] %v1551
    // Predicated region
    $region50: #{tpu_custom_call.1} parent=1 // pred_check
      _
    $region51: #{tpu_custom_call.1} parent=1 // pred_check_branch
      %1557 = sbr.rel (0) target = $region53
    $region52: #{tpu_custom_call.1} parent=1 // pred_region
      %s1559 = ssub.s32 256, 256
      %1560 = vsyncadd [#allocation4], %s1559
      %s1561 = sshll.u32 [#allocation11], 4
      %s1562 = int_to_ptr.vmem [resolvable:$true] %s1561
      %1567 = dma.vmem_to_hbm [thread:$0]  %s1562, 256, %s7, [#allocation4], 128, 128, 8
    $region53: #{tpu_custom_call.1} parent=1 // pred_fallthru
      _
    // Predicated region
    $region54: #{tpu_custom_call.1} parent=1 // pred_check
      _
    $region55: #{tpu_custom_call.1} parent=1 // pred_check_branch
      %1569 = sbr.rel (0) target = $region57
    $region56: #{tpu_custom_call.1} parent=1 // pred_region
      %1570 = dma.done [#allocation4], 256
    $region57: #{tpu_custom_call.1} parent=1 // pred_fallthru
      _
    %1571 = vsyncpa [#allocation3], 1
    %1572 = vsyncpa [#allocation6], 1
    %1573 = vsyncpa [#allocation9], 1
    %1574 = vsyncpa [#allocation4], 1

</llo_original>
